<compile_context>
chip_gen: v5e
topology: v5e:2x2
jax: 0.10.0
libtpu: 0.0.40
codegen_flags: <defaults>
</compile_context>

<pallas_src>
import jax
import jax.numpy as jnp
from jax import lax
from jax.experimental import pallas as pl
from jax.experimental.pallas import tpu as pltpu


def _lstm_kernel(x_ref, wih_ref, whh_ref, b_ref, wlin_ref, blin_ref,
                 out_ref, xw_scr):
    T = x_ref.shape[0]
    H = whh_ref.shape[0]

    # Hoisted input projection for all timesteps at once (+ combined bias).
    # Shape: (T, 4H), stored in VMEM scratch and sliced per step.
    xw_scr[...] = (
        jnp.dot(x_ref[...], wih_ref[...], preferred_element_type=jnp.float32)
        + b_ref[...])

    whh = whh_ref[...]                      # (H, 4H), load once

    def step(t, carry):
        h, c = carry                        # each (1, H), live in vregs
        gates = (xw_scr[pl.ds(t, 1), :]
                 + jnp.dot(h, whh, preferred_element_type=jnp.float32))  # (1, 4H)
        # i and f are contiguous -> one wider sigmoid (fewer EUP pushes).
        i_f = jax.nn.sigmoid(gates[:, 0:2 * H])
        i = i_f[:, 0:H]
        f = i_f[:, H:2 * H]
        g = jnp.tanh(gates[:, 2 * H:3 * H])
        o = jax.nn.sigmoid(gates[:, 3 * H:4 * H])
        c = f * c + i * g
        h = o * jnp.tanh(c)
        return (h, c)

    h0 = jnp.zeros((1, H), jnp.float32)
    c0 = jnp.zeros((1, H), jnp.float32)
    h, _ = lax.fori_loop(0, T, step, (h0, c0), unroll=True)

    # Linear head: only once, after the recurrence.
    out_ref[...] = (jnp.dot(h, wlin_ref[...], preferred_element_type=jnp.float32)
                    + blin_ref[...])


def lstm_forward(seq, params):
    """seq: (T, IN) float32.  Returns pred[-1], shape (OUT,)."""
    wih_t, whh_t, bias, wlin_t, blin = params
    T, IN = seq.shape
    H = whh_t.shape[0]
    OUT = wlin_t.shape[1]

    out = pl.pallas_call(
        _lstm_kernel,
        out_shape=jax.ShapeDtypeStruct((1, OUT), jnp.float32),
        # No grid / no BlockSpecs: single invocation, whole arrays in VMEM.
        scratch_shapes=[pltpu.VMEM((T, 4 * H), jnp.float32)],   # XW scratch
    )(seq.astype(jnp.float32), wih_t, whh_t, bias, wlin_t, blin)

    return out[0]


def lstm_reference(seq, params):
    """Pure-JAX reference matching torch.nn.LSTM + Linear semantics."""
    wih_t, whh_t, bias, wlin_t, blin = params
    H = whh_t.shape[0]

    def step(carry, x_t):
        h, c = carry
        gates = x_t[None, :] @ wih_t + h @ whh_t + bias
        i = jax.nn.sigmoid(gates[:, 0:H])
        f = jax.nn.sigmoid(gates[:, H:2 * H])
        g = jnp.tanh(gates[:, 2 * H:3 * H])
        o = jax.nn.sigmoid(gates[:, 3 * H:4 * H])
        c = f * c + i * g
        h = o * jnp.tanh(c)
        return (h, c), h

    h0 = jnp.zeros((1, H), jnp.float32)
    c0 = jnp.zeros((1, H), jnp.float32)
    (h_T, _), _ = lax.scan(step, (h0, c0), seq)
    pred_last = h_T @ wlin_t + blin
    return pred_last[0]


def init_params(key, input_size, hidden_size, output_size):
    """Deterministic init mimicking PyTorch's uniform(-1/sqrt(H), 1/sqrt(H))."""
    ks = jax.random.split(key, 6)
    bound = 1.0 / jnp.sqrt(jnp.float32(hidden_size))
    u = lambda k, shape: jax.random.uniform(k, shape, jnp.float32, -bound, bound)

    w_ih = u(ks[0], (4 * hidden_size, input_size))   # PyTorch layout
    w_hh = u(ks[1], (4 * hidden_size, hidden_size))
    b_ih = u(ks[2], (4 * hidden_size,))
    b_hh = u(ks[3], (4 * hidden_size,))
    w_lin = u(ks[4], (output_size, hidden_size))
    b_lin = u(ks[5], (output_size,))

    return (
        jnp.transpose(w_ih),                # (IN, 4H)
        jnp.transpose(w_hh),                # (H, 4H)
        (b_ih + b_hh)[None, :],             # (1, 4H)
        jnp.transpose(w_lin),               # (H, OUT)
        b_lin[None, :],                     # (1, OUT)
    )


if __name__ == "__main__":
    T, IN, H, OUT = 8, 4, 128, 1
    key = jax.random.PRNGKey(0)
    k_seq, k_par = jax.random.split(key)

    seq = jax.random.normal(k_seq, (T, IN), jnp.float32)
    params = init_params(k_par, IN, H, OUT)

    pred = jax.block_until_ready(lstm_forward(seq, params))
    ref = jax.block_until_ready(lstm_reference(seq, params))

    assert pred.shape == (OUT,)
    assert jnp.allclose(pred, ref, atol=1e-5, rtol=1e-5), (pred, ref)
    print("KERNEL_OK")
</pallas_src>

<mosaic_0001>
module attributes {stable_mosaic.version = 11 : i64} {
  func.func @_lstm_kernel(%arg0: memref<8x4xf32, #tpu.memory_space<vmem>>, %arg1: memref<4x512xf32, #tpu.memory_space<vmem>>, %arg2: memref<128x512xf32, #tpu.memory_space<vmem>>, %arg3: memref<1x512xf32, #tpu.memory_space<vmem>>, %arg4: memref<128x1xf32, #tpu.memory_space<vmem>>, %arg5: memref<1x1xf32, #tpu.memory_space<vmem>>, %arg6: memref<1x1xf32, #tpu.memory_space<vmem>>, %arg7: memref<8x512xf32, #tpu.memory_space<vmem>>) attributes {dimension_semantics = [], scalar_prefetch = 0 : i64, scratch_operands = 1 : i64, tpu.core_type = #tpu.core_type<tc>} {
    %c0 = arith.constant 0 : index
    %c0_0 = arith.constant 0 : index
    %0 = vector.load %arg0[%c0, %c0_0] : memref<8x4xf32, #tpu.memory_space<vmem>>, vector<8x4xf32>
    %c0_1 = arith.constant 0 : index
    %c0_2 = arith.constant 0 : index
    %1 = vector.load %arg1[%c0_1, %c0_2] : memref<4x512xf32, #tpu.memory_space<vmem>>, vector<4x512xf32>
    %cst = arith.constant dense<0.000000e+00> : vector<8x512xf32>
    %2 = tpu.matmul %0, %1, %cst {dimension_numbers = #tpu.dot_dimension_numbers<[1], [0], [0], [1], [0, 0, 1, 1], [], []>} : vector<8x4xf32>, vector<4x512xf32>, vector<8x512xf32> -> vector<8x512xf32>
    %c0_3 = arith.constant 0 : index
    %c0_4 = arith.constant 0 : index
    %3 = vector.load %arg3[%c0_3, %c0_4] : memref<1x512xf32, #tpu.memory_space<vmem>>, vector<1x512xf32>
    %4 = vector.broadcast %3 : vector<1x512xf32> to vector<8x512xf32>
    %5 = arith.addf %2, %4 : vector<8x512xf32>
    %c0_5 = arith.constant 0 : index
    %c0_6 = arith.constant 0 : index
    %6 = vector.load %arg7[%c0_5, %c0_6] : memref<8x512xf32, #tpu.memory_space<vmem>>, vector<8x512xf32>
    tpu.vector_store %arg7[%c0_5, %c0_6], %5 {strides = array<i32>} : memref<8x512xf32, #tpu.memory_space<vmem>>, vector<8x512xf32>,
    %c0_7 = arith.constant 0 : index
    %c0_8 = arith.constant 0 : index
    %7 = vector.load %arg2[%c0_7, %c0_8] : memref<128x512xf32, #tpu.memory_space<vmem>>, vector<128x512xf32>
    %cst_9 = arith.constant 0.000000e+00 : f32
    %8 = vector.broadcast %cst_9 : f32 to vector<1x128xf32>
    %cst_10 = arith.constant 0.000000e+00 : f32
    %9 = vector.broadcast %cst_10 : f32 to vector<1x128xf32>
    %c0_i32 = arith.constant 0 : i32
    %10 = arith.index_cast %c0_i32 : i32 to index
    %c0_11 = arith.constant 0 : index
    %11 = vector.load %arg7[%10, %c0_11] : memref<8x512xf32, #tpu.memory_space<vmem>>, vector<1x512xf32>
    %cst_12 = arith.constant dense<0.000000e+00> : vector<1x512xf32>
    %12 = tpu.matmul %8, %7, %cst_12 {dimension_numbers = #tpu.dot_dimension_numbers<[1], [0], [0], [1], [0, 0, 1, 1], [], []>} : vector<1x128xf32>, vector<128x512xf32>, vector<1x512xf32> -> vector<1x512xf32>
    %13 = arith.addf %11, %12 : vector<1x512xf32>
    %14 = vector.extract_strided_slice %13 {offsets = [0, 0], sizes = [1, 256], strides = [1, 1]} : vector<1x512xf32> to vector<1x256xf32>
    %15 = arith.negf %14 : vector<1x256xf32>
    %16 = math.exp %15 : vector<1x256xf32>
    %cst_13 = arith.constant 1.000000e+00 : f32
    %17 = vector.broadcast %cst_13 : f32 to vector<1x256xf32>
    %18 = arith.addf %17, %16 : vector<1x256xf32>
    %19 = arith.divf %17, %18 : vector<1x256xf32>
    %20 = vector.extract_strided_slice %19 {offsets = [0, 0], sizes = [1, 128], strides = [1, 1]} : vector<1x256xf32> to vector<1x128xf32>
    %21 = vector.extract_strided_slice %19 {offsets = [0, 128], sizes = [1, 128], strides = [1, 1]} : vector<1x256xf32> to vector<1x128xf32>
    %22 = vector.extract_strided_slice %13 {offsets = [0, 256], sizes = [1, 128], strides = [1, 1]} : vector<1x512xf32> to vector<1x128xf32>
    %23 = math.tanh %22 : vector<1x128xf32>
    %24 = vector.extract_strided_slice %13 {offsets = [0, 384], sizes = [1, 128], strides = [1, 1]} : vector<1x512xf32> to vector<1x128xf32>
    %25 = arith.negf %24 : vector<1x128xf32>
    %26 = math.exp %25 : vector<1x128xf32>
    %cst_14 = arith.constant 1.000000e+00 : f32
    %27 = vector.broadcast %cst_14 : f32 to vector<1x128xf32>
    %28 = arith.addf %27, %26 : vector<1x128xf32>
    %29 = arith.divf %27, %28 : vector<1x128xf32>
    %30 = arith.mulf %21, %9 : vector<1x128xf32>
    %31 = arith.mulf %20, %23 : vector<1x128xf32>
    %32 = arith.addf %30, %31 : vector<1x128xf32>
    %33 = math.tanh %32 : vector<1x128xf32>
    %34 = arith.mulf %29, %33 : vector<1x128xf32>
    %c1_i32 = arith.constant 1 : i32
    %35 = arith.index_cast %c1_i32 : i32 to index
    %c0_15 = arith.constant 0 : index
    %36 = vector.load %arg7[%35, %c0_15] : memref<8x512xf32, #tpu.memory_space<vmem>>, vector<1x512xf32>
    %cst_16 = arith.constant dense<0.000000e+00> : vector<1x512xf32>
    %37 = tpu.matmul %34, %7, %cst_16 {dimension_numbers = #tpu.dot_dimension_numbers<[1], [0], [0], [1], [0, 0, 1, 1], [], []>} : vector<1x128xf32>, vector<128x512xf32>, vector<1x512xf32> -> vector<1x512xf32>
    %38 = arith.addf %36, %37 : vector<1x512xf32>
    %39 = vector.extract_strided_slice %38 {offsets = [0, 0], sizes = [1, 256], strides = [1, 1]} : vector<1x512xf32> to vector<1x256xf32>
    %40 = arith.negf %39 : vector<1x256xf32>
    %41 = math.exp %40 : vector<1x256xf32>
    %cst_17 = arith.constant 1.000000e+00 : f32
    %42 = vector.broadcast %cst_17 : f32 to vector<1x256xf32>
    %43 = arith.addf %42, %41 : vector<1x256xf32>
    %44 = arith.divf %42, %43 : vector<1x256xf32>
    %45 = vector.extract_strided_slice %44 {offsets = [0, 0], sizes = [1, 128], strides = [1, 1]} : vector<1x256xf32> to vector<1x128xf32>
    %46 = vector.extract_strided_slice %44 {offsets = [0, 128], sizes = [1, 128], strides = [1, 1]} : vector<1x256xf32> to vector<1x128xf32>
    %47 = vector.extract_strided_slice %38 {offsets = [0, 256], sizes = [1, 128], strides = [1, 1]} : vector<1x512xf32> to vector<1x128xf32>
    %48 = math.tanh %47 : vector<1x128xf32>
    %49 = vector.extract_strided_slice %38 {offsets = [0, 384], sizes = [1, 128], strides = [1, 1]} : vector<1x512xf32> to vector<1x128xf32>
    %50 = arith.negf %49 : vector<1x128xf32>
    %51 = math.exp %50 : vector<1x128xf32>
    %cst_18 = arith.constant 1.000000e+00 : f32
    %52 = vector.broadcast %cst_18 : f32 to vector<1x128xf32>
    %53 = arith.addf %52, %51 : vector<1x128xf32>
    %54 = arith.divf %52, %53 : vector<1x128xf32>
    %55 = arith.mulf %46, %32 : vector<1x128xf32>
    %56 = arith.mulf %45, %48 : vector<1x128xf32>
    %57 = arith.addf %55, %56 : vector<1x128xf32>
    %58 = math.tanh %57 : vector<1x128xf32>
    %59 = arith.mulf %54, %58 : vector<1x128xf32>
    %c2_i32 = arith.constant 2 : i32
    %60 = arith.index_cast %c2_i32 : i32 to index
    %c0_19 = arith.constant 0 : index
    %61 = vector.load %arg7[%60, %c0_19] : memref<8x512xf32, #tpu.memory_space<vmem>>, vector<1x512xf32>
    %cst_20 = arith.constant dense<0.000000e+00> : vector<1x512xf32>
    %62 = tpu.matmul %59, %7, %cst_20 {dimension_numbers = #tpu.dot_dimension_numbers<[1], [0], [0], [1], [0, 0, 1, 1], [], []>} : vector<1x128xf32>, vector<128x512xf32>, vector<1x512xf32> -> vector<1x512xf32>
    %63 = arith.addf %61, %62 : vector<1x512xf32>
    %64 = vector.extract_strided_slice %63 {offsets = [0, 0], sizes = [1, 256], strides = [1, 1]} : vector<1x512xf32> to vector<1x256xf32>
    %65 = arith.negf %64 : vector<1x256xf32>
    %66 = math.exp %65 : vector<1x256xf32>
    %cst_21 = arith.constant 1.000000e+00 : f32
    %67 = vector.broadcast %cst_21 : f32 to vector<1x256xf32>
    %68 = arith.addf %67, %66 : vector<1x256xf32>
    %69 = arith.divf %67, %68 : vector<1x256xf32>
    %70 = vector.extract_strided_slice %69 {offsets = [0, 0], sizes = [1, 128], strides = [1, 1]} : vector<1x256xf32> to vector<1x128xf32>
    %71 = vector.extract_strided_slice %69 {offsets = [0, 128], sizes = [1, 128], strides = [1, 1]} : vector<1x256xf32> to vector<1x128xf32>
    %72 = vector.extract_strided_slice %63 {offsets = [0, 256], sizes = [1, 128], strides = [1, 1]} : vector<1x512xf32> to vector<1x128xf32>
    %73 = math.tanh %72 : vector<1x128xf32>
    %74 = vector.extract_strided_slice %63 {offsets = [0, 384], sizes = [1, 128], strides = [1, 1]} : vector<1x512xf32> to vector<1x128xf32>
    %75 = arith.negf %74 : vector<1x128xf32>
    %76 = math.exp %75 : vector<1x128xf32>
    %cst_22 = arith.constant 1.000000e+00 : f32
    %77 = vector.broadcast %cst_22 : f32 to vector<1x128xf32>
    %78 = arith.addf %77, %76 : vector<1x128xf32>
    %79 = arith.divf %77, %78 : vector<1x128xf32>
    %80 = arith.mulf %71, %57 : vector<1x128xf32>
    %81 = arith.mulf %70, %73 : vector<1x128xf32>
    %82 = arith.addf %80, %81 : vector<1x128xf32>
    %83 = math.tanh %82 : vector<1x128xf32>
    %84 = arith.mulf %79, %83 : vector<1x128xf32>
    %c3_i32 = arith.constant 3 : i32
    %85 = arith.index_cast %c3_i32 : i32 to index
    %c0_23 = arith.constant 0 : index
    %86 = vector.load %arg7[%85, %c0_23] : memref<8x512xf32, #tpu.memory_space<vmem>>, vector<1x512xf32>
    %cst_24 = arith.constant dense<0.000000e+00> : vector<1x512xf32>
    %87 = tpu.matmul %84, %7, %cst_24 {dimension_numbers = #tpu.dot_dimension_numbers<[1], [0], [0], [1], [0, 0, 1, 1], [], []>} : vector<1x128xf32>, vector<128x512xf32>, vector<1x512xf32> -> vector<1x512xf32>
    %88 = arith.addf %86, %87 : vector<1x512xf32>
    %89 = vector.extract_strided_slice %88 {offsets = [0, 0], sizes = [1, 256], strides = [1, 1]} : vector<1x512xf32> to vector<1x256xf32>
    %90 = arith.negf %89 : vector<1x256xf32>
    %91 = math.exp %90 : vector<1x256xf32>
    %cst_25 = arith.constant 1.000000e+00 : f32
    %92 = vector.broadcast %cst_25 : f32 to vector<1x256xf32>
    %93 = arith.addf %92, %91 : vector<1x256xf32>
    %94 = arith.divf %92, %93 : vector<1x256xf32>
    %95 = vector.extract_strided_slice %94 {offsets = [0, 0], sizes = [1, 128], strides = [1, 1]} : vector<1x256xf32> to vector<1x128xf32>
    %96 = vector.extract_strided_slice %94 {offsets = [0, 128], sizes = [1, 128], strides = [1, 1]} : vector<1x256xf32> to vector<1x128xf32>
    %97 = vector.extract_strided_slice %88 {offsets = [0, 256], sizes = [1, 128], strides = [1, 1]} : vector<1x512xf32> to vector<1x128xf32>
    %98 = math.tanh %97 : vector<1x128xf32>
    %99 = vector.extract_strided_slice %88 {offsets = [0, 384], sizes = [1, 128], strides = [1, 1]} : vector<1x512xf32> to vector<1x128xf32>
    %100 = arith.negf %99 : vector<1x128xf32>
    %101 = math.exp %100 : vector<1x128xf32>
    %cst_26 = arith.constant 1.000000e+00 : f32
    %102 = vector.broadcast %cst_26 : f32 to vector<1x128xf32>
    %103 = arith.addf %102, %101 : vector<1x128xf32>
    %104 = arith.divf %102, %103 : vector<1x128xf32>
    %105 = arith.mulf %96, %82 : vector<1x128xf32>
    %106 = arith.mulf %95, %98 : vector<1x128xf32>
    %107 = arith.addf %105, %106 : vector<1x128xf32>
    %108 = math.tanh %107 : vector<1x128xf32>
    %109 = arith.mulf %104, %108 : vector<1x128xf32>
    %c4_i32 = arith.constant 4 : i32
    %110 = arith.index_cast %c4_i32 : i32 to index
    %c0_27 = arith.constant 0 : index
    %111 = vector.load %arg7[%110, %c0_27] : memref<8x512xf32, #tpu.memory_space<vmem>>, vector<1x512xf32>
    %cst_28 = arith.constant dense<0.000000e+00> : vector<1x512xf32>
    %112 = tpu.matmul %109, %7, %cst_28 {dimension_numbers = #tpu.dot_dimension_numbers<[1], [0], [0], [1], [0, 0, 1, 1], [], []>} : vector<1x128xf32>, vector<128x512xf32>, vector<1x512xf32> -> vector<1x512xf32>
    %113 = arith.addf %111, %112 : vector<1x512xf32>
    %114 = vector.extract_strided_slice %113 {offsets = [0, 0], sizes = [1, 256], strides = [1, 1]} : vector<1x512xf32> to vector<1x256xf32>
    %115 = arith.negf %114 : vector<1x256xf32>
    %116 = math.exp %115 : vector<1x256xf32>
    %cst_29 = arith.constant 1.000000e+00 : f32
    %117 = vector.broadcast %cst_29 : f32 to vector<1x256xf32>
    %118 = arith.addf %117, %116 : vector<1x256xf32>
    %119 = arith.divf %117, %118 : vector<1x256xf32>
    %120 = vector.extract_strided_slice %119 {offsets = [0, 0], sizes = [1, 128], strides = [1, 1]} : vector<1x256xf32> to vector<1x128xf32>
    %121 = vector.extract_strided_slice %119 {offsets = [0, 128], sizes = [1, 128], strides = [1, 1]} : vector<1x256xf32> to vector<1x128xf32>
    %122 = vector.extract_strided_slice %113 {offsets = [0, 256], sizes = [1, 128], strides = [1, 1]} : vector<1x512xf32> to vector<1x128xf32>
    %123 = math.tanh %122 : vector<1x128xf32>
    %124 = vector.extract_strided_slice %113 {offsets = [0, 384], sizes = [1, 128], strides = [1, 1]} : vector<1x512xf32> to vector<1x128xf32>
    %125 = arith.negf %124 : vector<1x128xf32>
    %126 = math.exp %125 : vector<1x128xf32>
    %cst_30 = arith.constant 1.000000e+00 : f32
    %127 = vector.broadcast %cst_30 : f32 to vector<1x128xf32>
    %128 = arith.addf %127, %126 : vector<1x128xf32>
    %129 = arith.divf %127, %128 : vector<1x128xf32>
    %130 = arith.mulf %121, %107 : vector<1x128xf32>
    %131 = arith.mulf %120, %123 : vector<1x128xf32>
    %132 = arith.addf %130, %131 : vector<1x128xf32>
    %133 = math.tanh %132 : vector<1x128xf32>
    %134 = arith.mulf %129, %133 : vector<1x128xf32>
    %c5_i32 = arith.constant 5 : i32
    %135 = arith.index_cast %c5_i32 : i32 to index
    %c0_31 = arith.constant 0 : index
    %136 = vector.load %arg7[%135, %c0_31] : memref<8x512xf32, #tpu.memory_space<vmem>>, vector<1x512xf32>
    %cst_32 = arith.constant dense<0.000000e+00> : vector<1x512xf32>
    %137 = tpu.matmul %134, %7, %cst_32 {dimension_numbers = #tpu.dot_dimension_numbers<[1], [0], [0], [1], [0, 0, 1, 1], [], []>} : vector<1x128xf32>, vector<128x512xf32>, vector<1x512xf32> -> vector<1x512xf32>
    %138 = arith.addf %136, %137 : vector<1x512xf32>
    %139 = vector.extract_strided_slice %138 {offsets = [0, 0], sizes = [1, 256], strides = [1, 1]} : vector<1x512xf32> to vector<1x256xf32>
    %140 = arith.negf %139 : vector<1x256xf32>
    %141 = math.exp %140 : vector<1x256xf32>
    %cst_33 = arith.constant 1.000000e+00 : f32
    %142 = vector.broadcast %cst_33 : f32 to vector<1x256xf32>
    %143 = arith.addf %142, %141 : vector<1x256xf32>
    %144 = arith.divf %142, %143 : vector<1x256xf32>
    %145 = vector.extract_strided_slice %144 {offsets = [0, 0], sizes = [1, 128], strides = [1, 1]} : vector<1x256xf32> to vector<1x128xf32>
    %146 = vector.extract_strided_slice %144 {offsets = [0, 128], sizes = [1, 128], strides = [1, 1]} : vector<1x256xf32> to vector<1x128xf32>
    %147 = vector.extract_strided_slice %138 {offsets = [0, 256], sizes = [1, 128], strides = [1, 1]} : vector<1x512xf32> to vector<1x128xf32>
    %148 = math.tanh %147 : vector<1x128xf32>
    %149 = vector.extract_strided_slice %138 {offsets = [0, 384], sizes = [1, 128], strides = [1, 1]} : vector<1x512xf32> to vector<1x128xf32>
    %150 = arith.negf %149 : vector<1x128xf32>
    %151 = math.exp %150 : vector<1x128xf32>
    %cst_34 = arith.constant 1.000000e+00 : f32
    %152 = vector.broadcast %cst_34 : f32 to vector<1x128xf32>
    %153 = arith.addf %152, %151 : vector<1x128xf32>
    %154 = arith.divf %152, %153 : vector<1x128xf32>
    %155 = arith.mulf %146, %132 : vector<1x128xf32>
    %156 = arith.mulf %145, %148 : vector<1x128xf32>
    %157 = arith.addf %155, %156 : vector<1x128xf32>
    %158 = math.tanh %157 : vector<1x128xf32>
    %159 = arith.mulf %154, %158 : vector<1x128xf32>
    %c6_i32 = arith.constant 6 : i32
    %160 = arith.index_cast %c6_i32 : i32 to index
    %c0_35 = arith.constant 0 : index
    %161 = vector.load %arg7[%160, %c0_35] : memref<8x512xf32, #tpu.memory_space<vmem>>, vector<1x512xf32>
    %cst_36 = arith.constant dense<0.000000e+00> : vector<1x512xf32>
    %162 = tpu.matmul %159, %7, %cst_36 {dimension_numbers = #tpu.dot_dimension_numbers<[1], [0], [0], [1], [0, 0, 1, 1], [], []>} : vector<1x128xf32>, vector<128x512xf32>, vector<1x512xf32> -> vector<1x512xf32>
    %163 = arith.addf %161, %162 : vector<1x512xf32>
    %164 = vector.extract_strided_slice %163 {offsets = [0, 0], sizes = [1, 256], strides = [1, 1]} : vector<1x512xf32> to vector<1x256xf32>
    %165 = arith.negf %164 : vector<1x256xf32>
    %166 = math.exp %165 : vector<1x256xf32>
    %cst_37 = arith.constant 1.000000e+00 : f32
    %167 = vector.broadcast %cst_37 : f32 to vector<1x256xf32>
    %168 = arith.addf %167, %166 : vector<1x256xf32>
    %169 = arith.divf %167, %168 : vector<1x256xf32>
    %170 = vector.extract_strided_slice %169 {offsets = [0, 0], sizes = [1, 128], strides = [1, 1]} : vector<1x256xf32> to vector<1x128xf32>
    %171 = vector.extract_strided_slice %169 {offsets = [0, 128], sizes = [1, 128], strides = [1, 1]} : vector<1x256xf32> to vector<1x128xf32>
    %172 = vector.extract_strided_slice %163 {offsets = [0, 256], sizes = [1, 128], strides = [1, 1]} : vector<1x512xf32> to vector<1x128xf32>
    %173 = math.tanh %172 : vector<1x128xf32>
    %174 = vector.extract_strided_slice %163 {offsets = [0, 384], sizes = [1, 128], strides = [1, 1]} : vector<1x512xf32> to vector<1x128xf32>
    %175 = arith.negf %174 : vector<1x128xf32>
    %176 = math.exp %175 : vector<1x128xf32>
    %cst_38 = arith.constant 1.000000e+00 : f32
    %177 = vector.broadcast %cst_38 : f32 to vector<1x128xf32>
    %178 = arith.addf %177, %176 : vector<1x128xf32>
    %179 = arith.divf %177, %178 : vector<1x128xf32>
    %180 = arith.mulf %171, %157 : vector<1x128xf32>
    %181 = arith.mulf %170, %173 : vector<1x128xf32>
    %182 = arith.addf %180, %181 : vector<1x128xf32>
    %183 = math.tanh %182 : vector<1x128xf32>
    %184 = arith.mulf %179, %183 : vector<1x128xf32>
    %c7_i32 = arith.constant 7 : i32
    %185 = arith.index_cast %c7_i32 : i32 to index
    %c0_39 = arith.constant 0 : index
    %186 = vector.load %arg7[%185, %c0_39] : memref<8x512xf32, #tpu.memory_space<vmem>>, vector<1x512xf32>
    %cst_40 = arith.constant dense<0.000000e+00> : vector<1x512xf32>
    %187 = tpu.matmul %184, %7, %cst_40 {dimension_numbers = #tpu.dot_dimension_numbers<[1], [0], [0], [1], [0, 0, 1, 1], [], []>} : vector<1x128xf32>, vector<128x512xf32>, vector<1x512xf32> -> vector<1x512xf32>
    %188 = arith.addf %186, %187 : vector<1x512xf32>
    %189 = vector.extract_strided_slice %188 {offsets = [0, 0], sizes = [1, 256], strides = [1, 1]} : vector<1x512xf32> to vector<1x256xf32>
    %190 = arith.negf %189 : vector<1x256xf32>
    %191 = math.exp %190 : vector<1x256xf32>
    %cst_41 = arith.constant 1.000000e+00 : f32
    %192 = vector.broadcast %cst_41 : f32 to vector<1x256xf32>
    %193 = arith.addf %192, %191 : vector<1x256xf32>
    %194 = arith.divf %192, %193 : vector<1x256xf32>
    %195 = vector.extract_strided_slice %194 {offsets = [0, 0], sizes = [1, 128], strides = [1, 1]} : vector<1x256xf32> to vector<1x128xf32>
    %196 = vector.extract_strided_slice %194 {offsets = [0, 128], sizes = [1, 128], strides = [1, 1]} : vector<1x256xf32> to vector<1x128xf32>
    %197 = vector.extract_strided_slice %188 {offsets = [0, 256], sizes = [1, 128], strides = [1, 1]} : vector<1x512xf32> to vector<1x128xf32>
    %198 = math.tanh %197 : vector<1x128xf32>
    %199 = vector.extract_strided_slice %188 {offsets = [0, 384], sizes = [1, 128], strides = [1, 1]} : vector<1x512xf32> to vector<1x128xf32>
    %200 = arith.negf %199 : vector<1x128xf32>
    %201 = math.exp %200 : vector<1x128xf32>
    %cst_42 = arith.constant 1.000000e+00 : f32
    %202 = vector.broadcast %cst_42 : f32 to vector<1x128xf32>
    %203 = arith.addf %202, %201 : vector<1x128xf32>
    %204 = arith.divf %202, %203 : vector<1x128xf32>
    %205 = arith.mulf %196, %182 : vector<1x128xf32>
    %206 = arith.mulf %195, %198 : vector<1x128xf32>
    %207 = arith.addf %205, %206 : vector<1x128xf32>
    %208 = math.tanh %207 : vector<1x128xf32>
    %209 = arith.mulf %204, %208 : vector<1x128xf32>
    %c8_i32 = arith.constant 8 : i32
    %c0_43 = arith.constant 0 : index
    %c0_44 = arith.constant 0 : index
    %210 = vector.load %arg4[%c0_43, %c0_44] : memref<128x1xf32, #tpu.memory_space<vmem>>, vector<128x1xf32>
    %cst_45 = arith.constant dense<0.000000e+00> : vector<1x1xf32>
    %211 = tpu.matmul %209, %210, %cst_45 {dimension_numbers = #tpu.dot_dimension_numbers<[1], [0], [0], [1], [0, 0, 1, 1], [], []>} : vector<1x128xf32>, vector<128x1xf32>, vector<1x1xf32> -> vector<1x1xf32>
    %c0_46 = arith.constant 0 : index
    %c0_47 = arith.constant 0 : index
    %212 = vector.load %arg5[%c0_46, %c0_47] : memref<1x1xf32, #tpu.memory_space<vmem>>, vector<1x1xf32>
    %213 = arith.addf %211, %212 : vector<1x1xf32>
    %c0_48 = arith.constant 0 : index
    %c0_49 = arith.constant 0 : index
    %214 = vector.load %arg6[%c0_48, %c0_49] : memref<1x1xf32, #tpu.memory_space<vmem>>, vector<1x1xf32>
    tpu.vector_store %arg6[%c0_48, %c0_49], %213 {strides = array<i32>} : memref<1x1xf32, #tpu.memory_space<vmem>>, vector<1x1xf32>,
    return
  }
}

</mosaic_0001>

<llo_original>
// kernel: tpu_custom_call.1
$region0: #{tpu_custom_call.1}
  #allocation0 [shape = 'u32[]', space=smem, size = 0x4, offset = 0x4, fixed_abs, tag = 'smem constant byte address 0x4 - core index']
  #allocation1 [shape = 'u32[72,128]{1,0:T(1,128)}', space=vmem, size = 0x9000, scoped, tag = 'internal scratch']
  #allocation2 [shape = 'f32[8,512]{1,0:T(8,128)}', space=vmem, size = 0x4000, scoped, tag = 'scratch operand']
  #allocation3 [shape = 'f32[1,1]{1,0:T(1,128)S(1)}', space=vmem, size = 0x200, scoped, tag = 'scoped memory for tpu_custom_call.1']
  %s0 = inlined_call_operand.vmem [shape: f32[8,4], index: 0, kind: input, shape index: {}]
  %s1 = inlined_call_operand.vmem [shape: f32[4,512], index: 1, kind: input, shape index: {}]
  %s2 = inlined_call_operand.hbm [shape: f32[128,512], index: 2, kind: input, shape index: {}]
  %s3 = inlined_call_operand.vmem [shape: f32[1,512], index: 3, kind: input, shape index: {}]
  %s4 = inlined_call_operand.vmem [shape: f32[128,1], index: 4, kind: input, shape index: {}]
  %s5 = inlined_call_operand.<no memory space> [shape: f32[1,1], index: 5, kind: input, shape index: {}]
  %s6 = inlined_call_operand.hbm [shape: f32[1,1], index: 6, kind: output, shape index: {}]
  %s7 = sld [smem:[#allocation0]]
  $region38: #{tpu_custom_call.1} parent=0
    _
  %s9 = ssub.s32 1, %s7
  %s10 = scalar_select 0, %s9, %s7
  %v11 = vstv %s5
  %12 = vst [vmem:[#allocation3] sm:$0x1] %v11
  $region1: #{tpu_custom_call.1} parent=0
    #allocation4 [shape = 'u8[262144]{0}', space=vmem, size = 0x40000, scoped, tag = 'input window, operand 2, single buffered']
    #allocation5 [shape = 's32[1]{0}', space=sflag, size = 0x4, scoped, tag = 'scoped memory for tpu_custom_call.1']
    #allocation6 [shape = 's32[1]{0}', space=sflag, size = 0x4, scoped, tag = 'scoped memory for tpu_custom_call.1']
    #allocation7 [shape = 'u8[512]{0}', space=vmem, size = 0x400, scoped, tag = 'output window, operand 0, single buffered']
    %13 = vsyncpa [#allocation5], 0
    %14 = vsyncpa [#allocation6], 0
    // Predicated region
    $region2: #{tpu_custom_call.1} parent=1 // pred_check
      _
    $region3: #{tpu_custom_call.1} parent=1 // pred_check_branch
      %16 = sbr.rel (0) target = $region5
    $region4: #{tpu_custom_call.1} parent=1 // pred_region
      _
    $region5: #{tpu_custom_call.1} parent=1 // pred_fallthru
      _
    // Predicated region
    $region6: #{tpu_custom_call.1} parent=1 // pred_check
      _
    $region7: #{tpu_custom_call.1} parent=1 // pred_check_branch
      %18 = sbr.rel (0) target = $region9
    $region8: #{tpu_custom_call.1} parent=1 // pred_region
      _
    $region9: #{tpu_custom_call.1} parent=1 // pred_fallthru
      _
    // Predicated region
    $region10: #{tpu_custom_call.1} parent=1 // pred_check
      _
    $region11: #{tpu_custom_call.1} parent=1 // pred_check_branch
      %20 = sbr.rel (0) target = $region13
    $region12: #{tpu_custom_call.1} parent=1 // pred_region
      %22 = vsyncadd [#allocation5], 0
      %s23 = sshll.u32 %s2, 4
      %s24 = int_to_ptr.hbm [resolvable:$true] %s23
      %s25 = sshll.u32 [#allocation4], 4
      %s26 = int_to_ptr.vmem [resolvable:$true] %s25
      %31 = dma.hbm_to_vmem [thread:$0]  %s24, 8192, %s26, [#allocation5], 512, 512, 32
    $region13: #{tpu_custom_call.1} parent=1 // pred_fallthru
      _
    // Predicated region
    $region14: #{tpu_custom_call.1} parent=1 // pred_check
      _
    $region15: #{tpu_custom_call.1} parent=1 // pred_check_branch
      %33 = sbr.rel (0) target = $region17
    $region16: #{tpu_custom_call.1} parent=1 // pred_region
      _
    $region17: #{tpu_custom_call.1} parent=1 // pred_fallthru
      _
    // Predicated region
    $region18: #{tpu_custom_call.1} parent=1 // pred_check
      _
    $region19: #{tpu_custom_call.1} parent=1 // pred_check_branch
      %35 = sbr.rel (0) target = $region21
    $region20: #{tpu_custom_call.1} parent=1 // pred_region
      _
    $region21: #{tpu_custom_call.1} parent=1 // pred_fallthru
      _
    // Predicated region
    $region22: #{tpu_custom_call.1} parent=1 // pred_check
      _
    $region23: #{tpu_custom_call.1} parent=1 // pred_check_branch
      %37 = sbr.rel (0) target = $region25
    $region24: #{tpu_custom_call.1} parent=1 // pred_region
      _
    $region25: #{tpu_custom_call.1} parent=1 // pred_fallthru
      _
    // Predicated region
    $region26: #{tpu_custom_call.1} parent=1 // pred_check
      _
    $region27: #{tpu_custom_call.1} parent=1 // pred_check_branch
      %39 = sbr.rel (0) target = $region29
    $region28: #{tpu_custom_call.1} parent=1 // pred_region
      %41 = dma.done [#allocation5], 8192
    $region29: #{tpu_custom_call.1} parent=1 // pred_fallthru
      _
    %v42 = vld [vmem:[%s0] sm:$0xff]
    %v43 = vld [vmem:[%s1] sm:$0xff]
    %v44 = vld [vmem:[%s1 + $0x8] sm:$0xff]
    %v45 = vld [vmem:[%s3] sm:$0xf]
    %v47 = vperm.slane %v45, 0
    %v48 = vperm.slane %v45, 1
    %v49 = vperm.slane %v45, 2
    %v50 = vperm.slane %v45, 3
    %57 = vst [vmem:[#allocation1] ss:$2 sm:$0xff] %v43
    %s58 = scalar_lea.vmem [#allocation1], 16
    %59 = vst [vmem:[%s58] ss:$2 sm:$0xff] %v44
    %v60 = vld.sshfl [vmem:[#allocation1] sm:$0xff pattern:$0x75316420]
    %v61 = vld.sshfl [vmem:[#allocation1 + $0x8] sm:$0xff pattern:$0x75316420]
    %v62 = vld.sshfl [vmem:[#allocation1 + $0x10] sm:$0xff pattern:$0x75316420]
    %v63 = vld.sshfl [vmem:[#allocation1 + $0x18] sm:$0xff pattern:$0x75316420]
    %vm64 = vcmask 31744
    %v66 = vsel %vm64, %v42, 0
    %vm68 = vcmask 1043456
    %v69 = vsel %vm68, %v60, 0
    %v71 = vsel %vm68, %v61, 0
    %v73 = vsel %vm68, %v62, 0
    %v75 = vsel %vm68, %v63, 0
    %77 = vmatpush.msra.mxu0 0.0
    %78 = vmatpush.msra.mxu0 0.0
    %79 = vmatpush.msra.mxu0 0.0
    %80 = vmatpush.msra.mxu0 0.0
    %81 = vmatpush.msra.mxu0 0.0
    %82 = vmatpush.msra.mxu0 0.0
    %83 = vmatpush.msra.mxu0 0.0
    %84 = vmatpush.msra.mxu0 0.0
    %85 = vmatpush.msra.mxu0 0.0
    %86 = vmatpush.msra.mxu0 0.0
    %87 = vmatpush.msra.mxu0 0.0
    %88 = vmatpush.msra.mxu0 0.0
    %89 = vmatpush.msra.mxu0 0.0
    %90 = vmatpush.msra.mxu0 0.0
    %91 = vmatpush.msra.mxu0 0.0
    %92 = vmatpush.msra.mxu0 %v69
    %93 = vmatmul.f32.gmra.mxu0 %v66
    %v94 = vpop.f32.mrf.mxu0
    %v95 = vadd.f32 %v47, %v94
    %96 = vdwg.mxu0
    %97 = vmatpush.msra.mxu0 0.0
    %98 = vmatpush.msra.mxu0 0.0
    %99 = vmatpush.msra.mxu0 0.0
    %100 = vmatpush.msra.mxu0 0.0
    %101 = vmatpush.msra.mxu0 0.0
    %102 = vmatpush.msra.mxu0 0.0
    %103 = vmatpush.msra.mxu0 0.0
    %104 = vmatpush.msra.mxu0 0.0
    %105 = vmatpush.msra.mxu0 0.0
    %106 = vmatpush.msra.mxu0 0.0
    %107 = vmatpush.msra.mxu0 0.0
    %108 = vmatpush.msra.mxu0 0.0
    %109 = vmatpush.msra.mxu0 0.0
    %110 = vmatpush.msra.mxu0 0.0
    %111 = vmatpush.msra.mxu0 0.0
    %112 = vmatpush.msra.mxu0 %v71
    %113 = vmatmul.f32.gmra.mxu0 %v66
    %v114 = vpop.f32.mrf.mxu0
    %v115 = vadd.f32 %v48, %v114
    %116 = vdwg.mxu0
    %117 = vmatpush.msra.mxu0 0.0
    %118 = vmatpush.msra.mxu0 0.0
    %119 = vmatpush.msra.mxu0 0.0
    %120 = vmatpush.msra.mxu0 0.0
    %121 = vmatpush.msra.mxu0 0.0
    %122 = vmatpush.msra.mxu0 0.0
    %123 = vmatpush.msra.mxu0 0.0
    %124 = vmatpush.msra.mxu0 0.0
    %125 = vmatpush.msra.mxu0 0.0
    %126 = vmatpush.msra.mxu0 0.0
    %127 = vmatpush.msra.mxu0 0.0
    %128 = vmatpush.msra.mxu0 0.0
    %129 = vmatpush.msra.mxu0 0.0
    %130 = vmatpush.msra.mxu0 0.0
    %131 = vmatpush.msra.mxu0 0.0
    %132 = vmatpush.msra.mxu0 %v73
    %133 = vmatmul.f32.gmra.mxu0 %v66
    %v134 = vpop.f32.mrf.mxu0
    %v135 = vadd.f32 %v49, %v134
    %136 = vdwg.mxu0
    %137 = vmatpush.msra.mxu0 0.0
    %138 = vmatpush.msra.mxu0 0.0
    %139 = vmatpush.msra.mxu0 0.0
    %140 = vmatpush.msra.mxu0 0.0
    %141 = vmatpush.msra.mxu0 0.0
    %142 = vmatpush.msra.mxu0 0.0
    %143 = vmatpush.msra.mxu0 0.0
    %144 = vmatpush.msra.mxu0 0.0
    %145 = vmatpush.msra.mxu0 0.0
    %146 = vmatpush.msra.mxu0 0.0
    %147 = vmatpush.msra.mxu0 0.0
    %148 = vmatpush.msra.mxu0 0.0
    %149 = vmatpush.msra.mxu0 0.0
    %150 = vmatpush.msra.mxu0 0.0
    %151 = vmatpush.msra.mxu0 0.0
    %152 = vmatpush.msra.mxu0 %v75
    %153 = vmatmul.f32.gmra.mxu0 %v66
    %v154 = vpop.f32.mrf.mxu0
    %v155 = vadd.f32 %v50, %v154
    %156 = vdwg.mxu0
    %157 = vst [vmem:[#allocation2] sm:$0xff] %v95
    %158 = vst [vmem:[#allocation2 + $0x8] sm:$0xff] %v115
    %159 = vst [vmem:[#allocation2 + $0x10] sm:$0xff] %v135
    %160 = vst [vmem:[#allocation2 + $0x18] sm:$0xff] %v155
    %v161 = vld [vmem:[#allocation4] sm:$0xff]
    %v162 = vld [vmem:[#allocation4 + $0x8] sm:$0xff]
    %v163 = vld [vmem:[#allocation4 + $0x10] sm:$0xff]
    %v164 = vld [vmem:[#allocation4 + $0x18] sm:$0xff]
    %v165 = vld [vmem:[#allocation4 + $0x20] sm:$0xff]
    %v166 = vld [vmem:[#allocation4 + $0x28] sm:$0xff]
    %v167 = vld [vmem:[#allocation4 + $0x30] sm:$0xff]
    %v168 = vld [vmem:[#allocation4 + $0x38] sm:$0xff]
    %v169 = vld [vmem:[#allocation4 + $0x40] sm:$0xff]
    %v170 = vld [vmem:[#allocation4 + $0x48] sm:$0xff]
    %v171 = vld [vmem:[#allocation4 + $0x50] sm:$0xff]
    %v172 = vld [vmem:[#allocation4 + $0x58] sm:$0xff]
    %v173 = vld [vmem:[#allocation4 + $0x60] sm:$0xff]
    %v174 = vld [vmem:[#allocation4 + $0x68] sm:$0xff]
    %v175 = vld [vmem:[#allocation4 + $0x70] sm:$0xff]
    %v176 = vld [vmem:[#allocation4 + $0x78] sm:$0xff]
    %v177 = vld [vmem:[#allocation4 + $0x80] sm:$0xff]
    %v178 = vld [vmem:[#allocation4 + $0x88] sm:$0xff]
    %v179 = vld [vmem:[#allocation4 + $0x90] sm:$0xff]
    %v180 = vld [vmem:[#allocation4 + $0x98] sm:$0xff]
    %v181 = vld [vmem:[#allocation4 + $0xa0] sm:$0xff]
    %v182 = vld [vmem:[#allocation4 + $0xa8] sm:$0xff]
    %v183 = vld [vmem:[#allocation4 + $0xb0] sm:$0xff]
    %v184 = vld [vmem:[#allocation4 + $0xb8] sm:$0xff]
    %v185 = vld [vmem:[#allocation4 + $0xc0] sm:$0xff]
    %v186 = vld [vmem:[#allocation4 + $0xc8] sm:$0xff]
    %v187 = vld [vmem:[#allocation4 + $0xd0] sm:$0xff]
    %v188 = vld [vmem:[#allocation4 + $0xd8] sm:$0xff]
    %v189 = vld [vmem:[#allocation4 + $0xe0] sm:$0xff]
    %v190 = vld [vmem:[#allocation4 + $0xe8] sm:$0xff]
    %v191 = vld [vmem:[#allocation4 + $0xf0] sm:$0xff]
    %v192 = vld [vmem:[#allocation4 + $0xf8] sm:$0xff]
    %v193 = vld [vmem:[#allocation4 + $0x100] sm:$0xff]
    %v194 = vld [vmem:[#allocation4 + $0x108] sm:$0xff]
    %v195 = vld [vmem:[#allocation4 + $0x110] sm:$0xff]
    %v196 = vld [vmem:[#allocation4 + $0x118] sm:$0xff]
    %v197 = vld [vmem:[#allocation4 + $0x120] sm:$0xff]
    %v198 = vld [vmem:[#allocation4 + $0x128] sm:$0xff]
    %v199 = vld [vmem:[#allocation4 + $0x130] sm:$0xff]
    %v200 = vld [vmem:[#allocation4 + $0x138] sm:$0xff]
    %v201 = vld [vmem:[#allocation4 + $0x140] sm:$0xff]
    %v202 = vld [vmem:[#allocation4 + $0x148] sm:$0xff]
    %v203 = vld [vmem:[#allocation4 + $0x150] sm:$0xff]
    %v204 = vld [vmem:[#allocation4 + $0x158] sm:$0xff]
    %v205 = vld [vmem:[#allocation4 + $0x160] sm:$0xff]
    %v206 = vld [vmem:[#allocation4 + $0x168] sm:$0xff]
    %v207 = vld [vmem:[#allocation4 + $0x170] sm:$0xff]
    %v208 = vld [vmem:[#allocation4 + $0x178] sm:$0xff]
    %v209 = vld [vmem:[#allocation4 + $0x180] sm:$0xff]
    %v210 = vld [vmem:[#allocation4 + $0x188] sm:$0xff]
    %v211 = vld [vmem:[#allocation4 + $0x190] sm:$0xff]
    %v212 = vld [vmem:[#allocation4 + $0x198] sm:$0xff]
    %v213 = vld [vmem:[#allocation4 + $0x1a0] sm:$0xff]
    %v214 = vld [vmem:[#allocation4 + $0x1a8] sm:$0xff]
    %v215 = vld [vmem:[#allocation4 + $0x1b0] sm:$0xff]
    %v216 = vld [vmem:[#allocation4 + $0x1b8] sm:$0xff]
    %v217 = vld [vmem:[#allocation4 + $0x1c0] sm:$0xff]
    %v218 = vld [vmem:[#allocation4 + $0x1c8] sm:$0xff]
    %v219 = vld [vmem:[#allocation4 + $0x1d0] sm:$0xff]
    %v220 = vld [vmem:[#allocation4 + $0x1d8] sm:$0xff]
    %v221 = vld [vmem:[#allocation4 + $0x1e0] sm:$0xff]
    %v222 = vld [vmem:[#allocation4 + $0x1e8] sm:$0xff]
    %v223 = vld [vmem:[#allocation4 + $0x1f0] sm:$0xff]
    %v224 = vld [vmem:[#allocation4 + $0x1f8] sm:$0xff]
    %v225 = vld [vmem:[#allocation2] ss:$8 sm:$0xf]
    %226 = vmatpush.msra.mxu0 %v221
    %227 = vmatpush.msra.mxu0 %v217
    %228 = vmatpush.msra.mxu0 %v213
    %229 = vmatpush.msra.mxu0 %v209
    %230 = vmatpush.msra.mxu0 %v205
    %231 = vmatpush.msra.mxu0 %v201
    %232 = vmatpush.msra.mxu0 %v197
    %233 = vmatpush.msra.mxu0 %v193
    %234 = vmatpush.msra.mxu0 %v189
    %235 = vmatpush.msra.mxu0 %v185
    %236 = vmatpush.msra.mxu0 %v181
    %237 = vmatpush.msra.mxu0 %v177
    %238 = vmatpush.msra.mxu0 %v173
    %239 = vmatpush.msra.mxu0 %v169
    %240 = vmatpush.msra.mxu0 %v165
    %241 = vmatpush.msra.mxu0 %v161
    %242 = vmatmul.f32.gmra.mxu0 0.0
    %v243 = vpop.f32.mrf.mxu0
    %v244 = vadd.f32 0.0, %v243
    %245 = vdwg.mxu0
    %246 = vmatpush.msra.mxu0 %v222
    %247 = vmatpush.msra.mxu0 %v218
    %248 = vmatpush.msra.mxu0 %v214
    %249 = vmatpush.msra.mxu0 %v210
    %250 = vmatpush.msra.mxu0 %v206
    %251 = vmatpush.msra.mxu0 %v202
    %252 = vmatpush.msra.mxu0 %v198
    %253 = vmatpush.msra.mxu0 %v194
    %254 = vmatpush.msra.mxu0 %v190
    %255 = vmatpush.msra.mxu0 %v186
    %256 = vmatpush.msra.mxu0 %v182
    %257 = vmatpush.msra.mxu0 %v178
    %258 = vmatpush.msra.mxu0 %v174
    %259 = vmatpush.msra.mxu0 %v170
    %260 = vmatpush.msra.mxu0 %v166
    %261 = vmatpush.msra.mxu0 %v162
    %262 = vmatmul.f32.gmra.mxu0 0.0
    %v263 = vpop.f32.mrf.mxu0
    %v264 = vadd.f32 0.0, %v263
    %265 = vdwg.mxu0
    %266 = vmatpush.msra.mxu0 %v223
    %267 = vmatpush.msra.mxu0 %v219
    %268 = vmatpush.msra.mxu0 %v215
    %269 = vmatpush.msra.mxu0 %v211
    %270 = vmatpush.msra.mxu0 %v207
    %271 = vmatpush.msra.mxu0 %v203
    %272 = vmatpush.msra.mxu0 %v199
    %273 = vmatpush.msra.mxu0 %v195
    %274 = vmatpush.msra.mxu0 %v191
    %275 = vmatpush.msra.mxu0 %v187
    %276 = vmatpush.msra.mxu0 %v183
    %277 = vmatpush.msra.mxu0 %v179
    %278 = vmatpush.msra.mxu0 %v175
    %279 = vmatpush.msra.mxu0 %v171
    %280 = vmatpush.msra.mxu0 %v167
    %281 = vmatpush.msra.mxu0 %v163
    %282 = vmatmul.f32.gmra.mxu0 0.0
    %v283 = vpop.f32.mrf.mxu0
    %v284 = vadd.f32 0.0, %v283
    %285 = vdwg.mxu0
    %286 = vmatpush.msra.mxu0 %v224
    %287 = vmatpush.msra.mxu0 %v220
    %288 = vmatpush.msra.mxu0 %v216
    %289 = vmatpush.msra.mxu0 %v212
    %290 = vmatpush.msra.mxu0 %v208
    %291 = vmatpush.msra.mxu0 %v204
    %292 = vmatpush.msra.mxu0 %v200
    %293 = vmatpush.msra.mxu0 %v196
    %294 = vmatpush.msra.mxu0 %v192
    %295 = vmatpush.msra.mxu0 %v188
    %296 = vmatpush.msra.mxu0 %v184
    %297 = vmatpush.msra.mxu0 %v180
    %298 = vmatpush.msra.mxu0 %v176
    %299 = vmatpush.msra.mxu0 %v172
    %300 = vmatpush.msra.mxu0 %v168
    %301 = vmatpush.msra.mxu0 %v164
    %302 = vmatmul.f32.gmra.mxu0 0.0
    %v303 = vpop.f32.mrf.mxu0
    %v304 = vadd.f32 0.0, %v303
    %305 = vdwg.mxu0
    %v310 = vrot.slane %v264, 7
    %v311 = vrot.slane %v284, 6
    %v312 = vrot.slane %v304, 5
    %vm313 = vcmask 1040384
    %v314 = vsel %vm313, %v244, %v310
    %vm315 = vcmask 1042434
    %v316 = vsel %vm315, %v311, %v312
    %vm317 = vcmask 1041408
    %v318 = vsel %vm317, %v314, %v316
    %v320 = vadd.f32 %v225, %v318
    %v321 = vxor.u32 %v320, 2147483648
    %v322 = vmul.f32 %v321, 1.442695
    %v323 = vpow.pop %v322
    %v324 = vadd.f32 %v323, 1.0
    %v325 = vrcp.pop %v324
    %v326 = vmul.f32 %v324, %v325
    %v327 = vsub.f32 1.0, %v326
    %v328 = vmul.f32 %v325, %v327
    %v329 = vadd.f32 %v325, %v328
    %vm330 = vweird.f32 %v324
    %vm331 = vweird.f32 %v325
    %vm332 = vmor %vm330, %vm331
    %v333 = vsel %vm332, %v325, %v329
    %v334 = vand.u32 2147483647, %v324
    %vm335 = vcmp.eq.f32.partialorder %v334, 8.507059e+37
    %v336 = vand.u32 %v324, 2147483648
    %v337 = vor.u32 1.1754944e-38, %v336
    %v338 = vsel %vm335, %v337, %v333
    %v339 = vmul.f32 1.0, %v338
    %v341 = vrot.slane %v320, 2
    %v343 = vtanh.pop %v341
    %v344 = vrot.slane %v320, 3
    %v346 = vxor.u32 %v344, 2147483648
    %v347 = vmul.f32 %v346, 1.442695
    %v348 = vpow.pop %v347
    %v349 = vadd.f32 %v348, 1.0
    %v350 = vrcp.pop %v349
    %v351 = vmul.f32 %v349, %v350
    %v352 = vsub.f32 1.0, %v351
    %v353 = vmul.f32 %v350, %v352
    %v354 = vadd.f32 %v350, %v353
    %vm355 = vweird.f32 %v349
    %vm356 = vweird.f32 %v350
    %vm357 = vmor %vm355, %vm356
    %v358 = vsel %vm357, %v350, %v354
    %v359 = vand.u32 2147483647, %v349
    %vm360 = vcmp.eq.f32.partialorder %v359, 8.507059e+37
    %v361 = vand.u32 %v349, 2147483648
    %v362 = vor.u32 1.1754944e-38, %v361
    %v363 = vsel %vm360, %v362, %v358
    %v364 = vmul.f32 1.0, %v363
    %v366 = vrot.slane %v339, 1
    %v368 = vmul.f32 %v366, 0.0
    %v369 = vmul.f32 %v339, %v343
    %v370 = vadd.f32 %v368, %v369
    %v371 = vtanh.pop %v370
    %v372 = vmul.f32 %v364, %v371
    %s373 = scalar_lea.vmem [#allocation2], 1
    %v374 = vld [vmem:[%s373] ss:$8 sm:$0xf]
    %375 = vmatpush.msra.mxu0 %v221
    %376 = vmatpush.msra.mxu0 %v217
    %377 = vmatpush.msra.mxu0 %v213
    %378 = vmatpush.msra.mxu0 %v209
    %379 = vmatpush.msra.mxu0 %v205
    %380 = vmatpush.msra.mxu0 %v201
    %381 = vmatpush.msra.mxu0 %v197
    %382 = vmatpush.msra.mxu0 %v193
    %383 = vmatpush.msra.mxu0 %v189
    %384 = vmatpush.msra.mxu0 %v185
    %385 = vmatpush.msra.mxu0 %v181
    %386 = vmatpush.msra.mxu0 %v177
    %387 = vmatpush.msra.mxu0 %v173
    %388 = vmatpush.msra.mxu0 %v169
    %389 = vmatpush.msra.mxu0 %v165
    %390 = vmatpush.msra.mxu0 %v161
    %391 = vmatmul.f32.gmra.mxu0 %v372
    %v392 = vpop.f32.mrf.mxu0
    %v393 = vadd.f32 0.0, %v392
    %394 = vdwg.mxu0
    %395 = vmatpush.msra.mxu0 %v222
    %396 = vmatpush.msra.mxu0 %v218
    %397 = vmatpush.msra.mxu0 %v214
    %398 = vmatpush.msra.mxu0 %v210
    %399 = vmatpush.msra.mxu0 %v206
    %400 = vmatpush.msra.mxu0 %v202
    %401 = vmatpush.msra.mxu0 %v198
    %402 = vmatpush.msra.mxu0 %v194
    %403 = vmatpush.msra.mxu0 %v190
    %404 = vmatpush.msra.mxu0 %v186
    %405 = vmatpush.msra.mxu0 %v182
    %406 = vmatpush.msra.mxu0 %v178
    %407 = vmatpush.msra.mxu0 %v174
    %408 = vmatpush.msra.mxu0 %v170
    %409 = vmatpush.msra.mxu0 %v166
    %410 = vmatpush.msra.mxu0 %v162
    %411 = vmatmul.f32.gmra.mxu0 %v372
    %v412 = vpop.f32.mrf.mxu0
    %v413 = vadd.f32 0.0, %v412
    %414 = vdwg.mxu0
    %415 = vmatpush.msra.mxu0 %v223
    %416 = vmatpush.msra.mxu0 %v219
    %417 = vmatpush.msra.mxu0 %v215
    %418 = vmatpush.msra.mxu0 %v211
    %419 = vmatpush.msra.mxu0 %v207
    %420 = vmatpush.msra.mxu0 %v203
    %421 = vmatpush.msra.mxu0 %v199
    %422 = vmatpush.msra.mxu0 %v195
    %423 = vmatpush.msra.mxu0 %v191
    %424 = vmatpush.msra.mxu0 %v187
    %425 = vmatpush.msra.mxu0 %v183
    %426 = vmatpush.msra.mxu0 %v179
    %427 = vmatpush.msra.mxu0 %v175
    %428 = vmatpush.msra.mxu0 %v171
    %429 = vmatpush.msra.mxu0 %v167
    %430 = vmatpush.msra.mxu0 %v163
    %431 = vmatmul.f32.gmra.mxu0 %v372
    %v432 = vpop.f32.mrf.mxu0
    %v433 = vadd.f32 0.0, %v432
    %434 = vdwg.mxu0
    %435 = vmatpush.msra.mxu0 %v224
    %436 = vmatpush.msra.mxu0 %v220
    %437 = vmatpush.msra.mxu0 %v216
    %438 = vmatpush.msra.mxu0 %v212
    %439 = vmatpush.msra.mxu0 %v208
    %440 = vmatpush.msra.mxu0 %v204
    %441 = vmatpush.msra.mxu0 %v200
    %442 = vmatpush.msra.mxu0 %v196
    %443 = vmatpush.msra.mxu0 %v192
    %444 = vmatpush.msra.mxu0 %v188
    %445 = vmatpush.msra.mxu0 %v184
    %446 = vmatpush.msra.mxu0 %v180
    %447 = vmatpush.msra.mxu0 %v176
    %448 = vmatpush.msra.mxu0 %v172
    %449 = vmatpush.msra.mxu0 %v168
    %450 = vmatpush.msra.mxu0 %v164
    %451 = vmatmul.f32.gmra.mxu0 %v372
    %v452 = vpop.f32.mrf.mxu0
    %v453 = vadd.f32 0.0, %v452
    %454 = vdwg.mxu0
    %v459 = vrot.slane %v413, 7
    %v460 = vrot.slane %v433, 6
    %v461 = vrot.slane %v453, 5
    %v462 = vsel %vm313, %v393, %v459
    %v463 = vsel %vm315, %v460, %v461
    %v464 = vsel %vm317, %v462, %v463
    %v466 = vadd.f32 %v374, %v464
    %v467 = vxor.u32 %v466, 2147483648
    %v468 = vmul.f32 %v467, 1.442695
    %v469 = vpow.pop %v468
    %v470 = vadd.f32 %v469, 1.0
    %v471 = vrcp.pop %v470
    %v472 = vmul.f32 %v470, %v471
    %v473 = vsub.f32 1.0, %v472
    %v474 = vmul.f32 %v471, %v473
    %v475 = vadd.f32 %v471, %v474
    %vm476 = vweird.f32 %v470
    %vm477 = vweird.f32 %v471
    %vm478 = vmor %vm476, %vm477
    %v479 = vsel %vm478, %v471, %v475
    %v480 = vand.u32 2147483647, %v470
    %vm481 = vcmp.eq.f32.partialorder %v480, 8.507059e+37
    %v482 = vand.u32 %v470, 2147483648
    %v483 = vor.u32 1.1754944e-38, %v482
    %v484 = vsel %vm481, %v483, %v479
    %v485 = vmul.f32 1.0, %v484
    %v487 = vrot.slane %v466, 2
    %v489 = vtanh.pop %v487
    %v490 = vrot.slane %v466, 3
    %v492 = vxor.u32 %v490, 2147483648
    %v493 = vmul.f32 %v492, 1.442695
    %v494 = vpow.pop %v493
    %v495 = vadd.f32 %v494, 1.0
    %v496 = vrcp.pop %v495
    %v497 = vmul.f32 %v495, %v496
    %v498 = vsub.f32 1.0, %v497
    %v499 = vmul.f32 %v496, %v498
    %v500 = vadd.f32 %v496, %v499
    %vm501 = vweird.f32 %v495
    %vm502 = vweird.f32 %v496
    %vm503 = vmor %vm501, %vm502
    %v504 = vsel %vm503, %v496, %v500
    %v505 = vand.u32 2147483647, %v495
    %vm506 = vcmp.eq.f32.partialorder %v505, 8.507059e+37
    %v507 = vand.u32 %v495, 2147483648
    %v508 = vor.u32 1.1754944e-38, %v507
    %v509 = vsel %vm506, %v508, %v504
    %v510 = vmul.f32 1.0, %v509
    %v512 = vrot.slane %v485, 1
    %v514 = vmul.f32 %v512, %v370
    %v515 = vmul.f32 %v485, %v489
    %v516 = vadd.f32 %v514, %v515
    %v517 = vtanh.pop %v516
    %v518 = vmul.f32 %v510, %v517
    %s519 = scalar_lea.vmem [#allocation2], 2
    %v520 = vld [vmem:[%s519] ss:$8 sm:$0xf]
    %521 = vmatpush.msra.mxu0 %v221
    %522 = vmatpush.msra.mxu0 %v217
    %523 = vmatpush.msra.mxu0 %v213
    %524 = vmatpush.msra.mxu0 %v209
    %525 = vmatpush.msra.mxu0 %v205
    %526 = vmatpush.msra.mxu0 %v201
    %527 = vmatpush.msra.mxu0 %v197
    %528 = vmatpush.msra.mxu0 %v193
    %529 = vmatpush.msra.mxu0 %v189
    %530 = vmatpush.msra.mxu0 %v185
    %531 = vmatpush.msra.mxu0 %v181
    %532 = vmatpush.msra.mxu0 %v177
    %533 = vmatpush.msra.mxu0 %v173
    %534 = vmatpush.msra.mxu0 %v169
    %535 = vmatpush.msra.mxu0 %v165
    %536 = vmatpush.msra.mxu0 %v161
    %537 = vmatmul.f32.gmra.mxu0 %v518
    %v538 = vpop.f32.mrf.mxu0
    %v539 = vadd.f32 0.0, %v538
    %540 = vdwg.mxu0
    %541 = vmatpush.msra.mxu0 %v222
    %542 = vmatpush.msra.mxu0 %v218
    %543 = vmatpush.msra.mxu0 %v214
    %544 = vmatpush.msra.mxu0 %v210
    %545 = vmatpush.msra.mxu0 %v206
    %546 = vmatpush.msra.mxu0 %v202
    %547 = vmatpush.msra.mxu0 %v198
    %548 = vmatpush.msra.mxu0 %v194
    %549 = vmatpush.msra.mxu0 %v190
    %550 = vmatpush.msra.mxu0 %v186
    %551 = vmatpush.msra.mxu0 %v182
    %552 = vmatpush.msra.mxu0 %v178
    %553 = vmatpush.msra.mxu0 %v174
    %554 = vmatpush.msra.mxu0 %v170
    %555 = vmatpush.msra.mxu0 %v166
    %556 = vmatpush.msra.mxu0 %v162
    %557 = vmatmul.f32.gmra.mxu0 %v518
    %v558 = vpop.f32.mrf.mxu0
    %v559 = vadd.f32 0.0, %v558
    %560 = vdwg.mxu0
    %561 = vmatpush.msra.mxu0 %v223
    %562 = vmatpush.msra.mxu0 %v219
    %563 = vmatpush.msra.mxu0 %v215
    %564 = vmatpush.msra.mxu0 %v211
    %565 = vmatpush.msra.mxu0 %v207
    %566 = vmatpush.msra.mxu0 %v203
    %567 = vmatpush.msra.mxu0 %v199
    %568 = vmatpush.msra.mxu0 %v195
    %569 = vmatpush.msra.mxu0 %v191
    %570 = vmatpush.msra.mxu0 %v187
    %571 = vmatpush.msra.mxu0 %v183
    %572 = vmatpush.msra.mxu0 %v179
    %573 = vmatpush.msra.mxu0 %v175
    %574 = vmatpush.msra.mxu0 %v171
    %575 = vmatpush.msra.mxu0 %v167
    %576 = vmatpush.msra.mxu0 %v163
    %577 = vmatmul.f32.gmra.mxu0 %v518
    %v578 = vpop.f32.mrf.mxu0
    %v579 = vadd.f32 0.0, %v578
    %580 = vdwg.mxu0
    %581 = vmatpush.msra.mxu0 %v224
    %582 = vmatpush.msra.mxu0 %v220
    %583 = vmatpush.msra.mxu0 %v216
    %584 = vmatpush.msra.mxu0 %v212
    %585 = vmatpush.msra.mxu0 %v208
    %586 = vmatpush.msra.mxu0 %v204
    %587 = vmatpush.msra.mxu0 %v200
    %588 = vmatpush.msra.mxu0 %v196
    %589 = vmatpush.msra.mxu0 %v192
    %590 = vmatpush.msra.mxu0 %v188
    %591 = vmatpush.msra.mxu0 %v184
    %592 = vmatpush.msra.mxu0 %v180
    %593 = vmatpush.msra.mxu0 %v176
    %594 = vmatpush.msra.mxu0 %v172
    %595 = vmatpush.msra.mxu0 %v168
    %596 = vmatpush.msra.mxu0 %v164
    %597 = vmatmul.f32.gmra.mxu0 %v518
    %v598 = vpop.f32.mrf.mxu0
    %v599 = vadd.f32 0.0, %v598
    %600 = vdwg.mxu0
    %v605 = vrot.slane %v559, 7
    %v606 = vrot.slane %v579, 6
    %v607 = vrot.slane %v599, 5
    %v608 = vsel %vm313, %v539, %v605
    %v609 = vsel %vm315, %v606, %v607
    %v610 = vsel %vm317, %v608, %v609
    %v612 = vadd.f32 %v520, %v610
    %v613 = vxor.u32 %v612, 2147483648
    %v614 = vmul.f32 %v613, 1.442695
    %v615 = vpow.pop %v614
    %v616 = vadd.f32 %v615, 1.0
    %v617 = vrcp.pop %v616
    %v618 = vmul.f32 %v616, %v617
    %v619 = vsub.f32 1.0, %v618
    %v620 = vmul.f32 %v617, %v619
    %v621 = vadd.f32 %v617, %v620
    %vm622 = vweird.f32 %v616
    %vm623 = vweird.f32 %v617
    %vm624 = vmor %vm622, %vm623
    %v625 = vsel %vm624, %v617, %v621
    %v626 = vand.u32 2147483647, %v616
    %vm627 = vcmp.eq.f32.partialorder %v626, 8.507059e+37
    %v628 = vand.u32 %v616, 2147483648
    %v629 = vor.u32 1.1754944e-38, %v628
    %v630 = vsel %vm627, %v629, %v625
    %v631 = vmul.f32 1.0, %v630
    %v633 = vrot.slane %v612, 2
    %v635 = vtanh.pop %v633
    %v636 = vrot.slane %v612, 3
    %v638 = vxor.u32 %v636, 2147483648
    %v639 = vmul.f32 %v638, 1.442695
    %v640 = vpow.pop %v639
    %v641 = vadd.f32 %v640, 1.0
    %v642 = vrcp.pop %v641
    %v643 = vmul.f32 %v641, %v642
    %v644 = vsub.f32 1.0, %v643
    %v645 = vmul.f32 %v642, %v644
    %v646 = vadd.f32 %v642, %v645
    %vm647 = vweird.f32 %v641
    %vm648 = vweird.f32 %v642
    %vm649 = vmor %vm647, %vm648
    %v650 = vsel %vm649, %v642, %v646
    %v651 = vand.u32 2147483647, %v641
    %vm652 = vcmp.eq.f32.partialorder %v651, 8.507059e+37
    %v653 = vand.u32 %v641, 2147483648
    %v654 = vor.u32 1.1754944e-38, %v653
    %v655 = vsel %vm652, %v654, %v650
    %v656 = vmul.f32 1.0, %v655
    %v658 = vrot.slane %v631, 1
    %v660 = vmul.f32 %v658, %v516
    %v661 = vmul.f32 %v631, %v635
    %v662 = vadd.f32 %v660, %v661
    %v663 = vtanh.pop %v662
    %v664 = vmul.f32 %v656, %v663
    %s665 = scalar_lea.vmem [#allocation2], 3
    %v666 = vld [vmem:[%s665] ss:$8 sm:$0xf]
    %667 = vmatpush.msra.mxu0 %v221
    %668 = vmatpush.msra.mxu0 %v217
    %669 = vmatpush.msra.mxu0 %v213
    %670 = vmatpush.msra.mxu0 %v209
    %671 = vmatpush.msra.mxu0 %v205
    %672 = vmatpush.msra.mxu0 %v201
    %673 = vmatpush.msra.mxu0 %v197
    %674 = vmatpush.msra.mxu0 %v193
    %675 = vmatpush.msra.mxu0 %v189
    %676 = vmatpush.msra.mxu0 %v185
    %677 = vmatpush.msra.mxu0 %v181
    %678 = vmatpush.msra.mxu0 %v177
    %679 = vmatpush.msra.mxu0 %v173
    %680 = vmatpush.msra.mxu0 %v169
    %681 = vmatpush.msra.mxu0 %v165
    %682 = vmatpush.msra.mxu0 %v161
    %683 = vmatmul.f32.gmra.mxu0 %v664
    %v684 = vpop.f32.mrf.mxu0
    %v685 = vadd.f32 0.0, %v684
    %686 = vdwg.mxu0
    %687 = vmatpush.msra.mxu0 %v222
    %688 = vmatpush.msra.mxu0 %v218
    %689 = vmatpush.msra.mxu0 %v214
    %690 = vmatpush.msra.mxu0 %v210
    %691 = vmatpush.msra.mxu0 %v206
    %692 = vmatpush.msra.mxu0 %v202
    %693 = vmatpush.msra.mxu0 %v198
    %694 = vmatpush.msra.mxu0 %v194
    %695 = vmatpush.msra.mxu0 %v190
    %696 = vmatpush.msra.mxu0 %v186
    %697 = vmatpush.msra.mxu0 %v182
    %698 = vmatpush.msra.mxu0 %v178
    %699 = vmatpush.msra.mxu0 %v174
    %700 = vmatpush.msra.mxu0 %v170
    %701 = vmatpush.msra.mxu0 %v166
    %702 = vmatpush.msra.mxu0 %v162
    %703 = vmatmul.f32.gmra.mxu0 %v664
    %v704 = vpop.f32.mrf.mxu0
    %v705 = vadd.f32 0.0, %v704
    %706 = vdwg.mxu0
    %707 = vmatpush.msra.mxu0 %v223
    %708 = vmatpush.msra.mxu0 %v219
    %709 = vmatpush.msra.mxu0 %v215
    %710 = vmatpush.msra.mxu0 %v211
    %711 = vmatpush.msra.mxu0 %v207
    %712 = vmatpush.msra.mxu0 %v203
    %713 = vmatpush.msra.mxu0 %v199
    %714 = vmatpush.msra.mxu0 %v195
    %715 = vmatpush.msra.mxu0 %v191
    %716 = vmatpush.msra.mxu0 %v187
    %717 = vmatpush.msra.mxu0 %v183
    %718 = vmatpush.msra.mxu0 %v179
    %719 = vmatpush.msra.mxu0 %v175
    %720 = vmatpush.msra.mxu0 %v171
    %721 = vmatpush.msra.mxu0 %v167
    %722 = vmatpush.msra.mxu0 %v163
    %723 = vmatmul.f32.gmra.mxu0 %v664
    %v724 = vpop.f32.mrf.mxu0
    %v725 = vadd.f32 0.0, %v724
    %726 = vdwg.mxu0
    %727 = vmatpush.msra.mxu0 %v224
    %728 = vmatpush.msra.mxu0 %v220
    %729 = vmatpush.msra.mxu0 %v216
    %730 = vmatpush.msra.mxu0 %v212
    %731 = vmatpush.msra.mxu0 %v208
    %732 = vmatpush.msra.mxu0 %v204
    %733 = vmatpush.msra.mxu0 %v200
    %734 = vmatpush.msra.mxu0 %v196
    %735 = vmatpush.msra.mxu0 %v192
    %736 = vmatpush.msra.mxu0 %v188
    %737 = vmatpush.msra.mxu0 %v184
    %738 = vmatpush.msra.mxu0 %v180
    %739 = vmatpush.msra.mxu0 %v176
    %740 = vmatpush.msra.mxu0 %v172
    %741 = vmatpush.msra.mxu0 %v168
    %742 = vmatpush.msra.mxu0 %v164
    %743 = vmatmul.f32.gmra.mxu0 %v664
    %v744 = vpop.f32.mrf.mxu0
    %v745 = vadd.f32 0.0, %v744
    %746 = vdwg.mxu0
    %v751 = vrot.slane %v705, 7
    %v752 = vrot.slane %v725, 6
    %v753 = vrot.slane %v745, 5
    %v754 = vsel %vm313, %v685, %v751
    %v755 = vsel %vm315, %v752, %v753
    %v756 = vsel %vm317, %v754, %v755
    %v758 = vadd.f32 %v666, %v756
    %v759 = vxor.u32 %v758, 2147483648
    %v760 = vmul.f32 %v759, 1.442695
    %v761 = vpow.pop %v760
    %v762 = vadd.f32 %v761, 1.0
    %v763 = vrcp.pop %v762
    %v764 = vmul.f32 %v762, %v763
    %v765 = vsub.f32 1.0, %v764
    %v766 = vmul.f32 %v763, %v765
    %v767 = vadd.f32 %v763, %v766
    %vm768 = vweird.f32 %v762
    %vm769 = vweird.f32 %v763
    %vm770 = vmor %vm768, %vm769
    %v771 = vsel %vm770, %v763, %v767
    %v772 = vand.u32 2147483647, %v762
    %vm773 = vcmp.eq.f32.partialorder %v772, 8.507059e+37
    %v774 = vand.u32 %v762, 2147483648
    %v775 = vor.u32 1.1754944e-38, %v774
    %v776 = vsel %vm773, %v775, %v771
    %v777 = vmul.f32 1.0, %v776
    %v779 = vrot.slane %v758, 2
    %v781 = vtanh.pop %v779
    %v782 = vrot.slane %v758, 3
    %v784 = vxor.u32 %v782, 2147483648
    %v785 = vmul.f32 %v784, 1.442695
    %v786 = vpow.pop %v785
    %v787 = vadd.f32 %v786, 1.0
    %v788 = vrcp.pop %v787
    %v789 = vmul.f32 %v787, %v788
    %v790 = vsub.f32 1.0, %v789
    %v791 = vmul.f32 %v788, %v790
    %v792 = vadd.f32 %v788, %v791
    %vm793 = vweird.f32 %v787
    %vm794 = vweird.f32 %v788
    %vm795 = vmor %vm793, %vm794
    %v796 = vsel %vm795, %v788, %v792
    %v797 = vand.u32 2147483647, %v787
    %vm798 = vcmp.eq.f32.partialorder %v797, 8.507059e+37
    %v799 = vand.u32 %v787, 2147483648
    %v800 = vor.u32 1.1754944e-38, %v799
    %v801 = vsel %vm798, %v800, %v796
    %v802 = vmul.f32 1.0, %v801
    %v804 = vrot.slane %v777, 1
    %v806 = vmul.f32 %v804, %v662
    %v807 = vmul.f32 %v777, %v781
    %v808 = vadd.f32 %v806, %v807
    %v809 = vtanh.pop %v808
    %v810 = vmul.f32 %v802, %v809
    %s811 = scalar_lea.vmem [#allocation2], 4
    %v812 = vld [vmem:[%s811] ss:$8 sm:$0xf]
    %813 = vmatpush.msra.mxu0 %v221
    %814 = vmatpush.msra.mxu0 %v217
    %815 = vmatpush.msra.mxu0 %v213
    %816 = vmatpush.msra.mxu0 %v209
    %817 = vmatpush.msra.mxu0 %v205
    %818 = vmatpush.msra.mxu0 %v201
    %819 = vmatpush.msra.mxu0 %v197
    %820 = vmatpush.msra.mxu0 %v193
    %821 = vmatpush.msra.mxu0 %v189
    %822 = vmatpush.msra.mxu0 %v185
    %823 = vmatpush.msra.mxu0 %v181
    %824 = vmatpush.msra.mxu0 %v177
    %825 = vmatpush.msra.mxu0 %v173
    %826 = vmatpush.msra.mxu0 %v169
    %827 = vmatpush.msra.mxu0 %v165
    %828 = vmatpush.msra.mxu0 %v161
    %829 = vmatmul.f32.gmra.mxu0 %v810
    %v830 = vpop.f32.mrf.mxu0
    %v831 = vadd.f32 0.0, %v830
    %832 = vdwg.mxu0
    %833 = vmatpush.msra.mxu0 %v222
    %834 = vmatpush.msra.mxu0 %v218
    %835 = vmatpush.msra.mxu0 %v214
    %836 = vmatpush.msra.mxu0 %v210
    %837 = vmatpush.msra.mxu0 %v206
    %838 = vmatpush.msra.mxu0 %v202
    %839 = vmatpush.msra.mxu0 %v198
    %840 = vmatpush.msra.mxu0 %v194
    %841 = vmatpush.msra.mxu0 %v190
    %842 = vmatpush.msra.mxu0 %v186
    %843 = vmatpush.msra.mxu0 %v182
    %844 = vmatpush.msra.mxu0 %v178
    %845 = vmatpush.msra.mxu0 %v174
    %846 = vmatpush.msra.mxu0 %v170
    %847 = vmatpush.msra.mxu0 %v166
    %848 = vmatpush.msra.mxu0 %v162
    %849 = vmatmul.f32.gmra.mxu0 %v810
    %v850 = vpop.f32.mrf.mxu0
    %v851 = vadd.f32 0.0, %v850
    %852 = vdwg.mxu0
    %853 = vmatpush.msra.mxu0 %v223
    %854 = vmatpush.msra.mxu0 %v219
    %855 = vmatpush.msra.mxu0 %v215
    %856 = vmatpush.msra.mxu0 %v211
    %857 = vmatpush.msra.mxu0 %v207
    %858 = vmatpush.msra.mxu0 %v203
    %859 = vmatpush.msra.mxu0 %v199
    %860 = vmatpush.msra.mxu0 %v195
    %861 = vmatpush.msra.mxu0 %v191
    %862 = vmatpush.msra.mxu0 %v187
    %863 = vmatpush.msra.mxu0 %v183
    %864 = vmatpush.msra.mxu0 %v179
    %865 = vmatpush.msra.mxu0 %v175
    %866 = vmatpush.msra.mxu0 %v171
    %867 = vmatpush.msra.mxu0 %v167
    %868 = vmatpush.msra.mxu0 %v163
    %869 = vmatmul.f32.gmra.mxu0 %v810
    %v870 = vpop.f32.mrf.mxu0
    %v871 = vadd.f32 0.0, %v870
    %872 = vdwg.mxu0
    %873 = vmatpush.msra.mxu0 %v224
    %874 = vmatpush.msra.mxu0 %v220
    %875 = vmatpush.msra.mxu0 %v216
    %876 = vmatpush.msra.mxu0 %v212
    %877 = vmatpush.msra.mxu0 %v208
    %878 = vmatpush.msra.mxu0 %v204
    %879 = vmatpush.msra.mxu0 %v200
    %880 = vmatpush.msra.mxu0 %v196
    %881 = vmatpush.msra.mxu0 %v192
    %882 = vmatpush.msra.mxu0 %v188
    %883 = vmatpush.msra.mxu0 %v184
    %884 = vmatpush.msra.mxu0 %v180
    %885 = vmatpush.msra.mxu0 %v176
    %886 = vmatpush.msra.mxu0 %v172
    %887 = vmatpush.msra.mxu0 %v168
    %888 = vmatpush.msra.mxu0 %v164
    %889 = vmatmul.f32.gmra.mxu0 %v810
    %v890 = vpop.f32.mrf.mxu0
    %v891 = vadd.f32 0.0, %v890
    %892 = vdwg.mxu0
    %v897 = vrot.slane %v851, 7
    %v898 = vrot.slane %v871, 6
    %v899 = vrot.slane %v891, 5
    %v900 = vsel %vm313, %v831, %v897
    %v901 = vsel %vm315, %v898, %v899
    %v902 = vsel %vm317, %v900, %v901
    %v904 = vadd.f32 %v812, %v902
    %v905 = vxor.u32 %v904, 2147483648
    %v906 = vmul.f32 %v905, 1.442695
    %v907 = vpow.pop %v906
    %v908 = vadd.f32 %v907, 1.0
    %v909 = vrcp.pop %v908
    %v910 = vmul.f32 %v908, %v909
    %v911 = vsub.f32 1.0, %v910
    %v912 = vmul.f32 %v909, %v911
    %v913 = vadd.f32 %v909, %v912
    %vm914 = vweird.f32 %v908
    %vm915 = vweird.f32 %v909
    %vm916 = vmor %vm914, %vm915
    %v917 = vsel %vm916, %v909, %v913
    %v918 = vand.u32 2147483647, %v908
    %vm919 = vcmp.eq.f32.partialorder %v918, 8.507059e+37
    %v920 = vand.u32 %v908, 2147483648
    %v921 = vor.u32 1.1754944e-38, %v920
    %v922 = vsel %vm919, %v921, %v917
    %v923 = vmul.f32 1.0, %v922
    %v925 = vrot.slane %v904, 2
    %v927 = vtanh.pop %v925
    %v928 = vrot.slane %v904, 3
    %v930 = vxor.u32 %v928, 2147483648
    %v931 = vmul.f32 %v930, 1.442695
    %v932 = vpow.pop %v931
    %v933 = vadd.f32 %v932, 1.0
    %v934 = vrcp.pop %v933
    %v935 = vmul.f32 %v933, %v934
    %v936 = vsub.f32 1.0, %v935
    %v937 = vmul.f32 %v934, %v936
    %v938 = vadd.f32 %v934, %v937
    %vm939 = vweird.f32 %v933
    %vm940 = vweird.f32 %v934
    %vm941 = vmor %vm939, %vm940
    %v942 = vsel %vm941, %v934, %v938
    %v943 = vand.u32 2147483647, %v933
    %vm944 = vcmp.eq.f32.partialorder %v943, 8.507059e+37
    %v945 = vand.u32 %v933, 2147483648
    %v946 = vor.u32 1.1754944e-38, %v945
    %v947 = vsel %vm944, %v946, %v942
    %v948 = vmul.f32 1.0, %v947
    %v950 = vrot.slane %v923, 1
    %v952 = vmul.f32 %v950, %v808
    %v953 = vmul.f32 %v923, %v927
    %v954 = vadd.f32 %v952, %v953
    %v955 = vtanh.pop %v954
    %v956 = vmul.f32 %v948, %v955
    %s957 = scalar_lea.vmem [#allocation2], 5
    %v958 = vld [vmem:[%s957] ss:$8 sm:$0xf]
    %959 = vmatpush.msra.mxu0 %v221
    %960 = vmatpush.msra.mxu0 %v217
    %961 = vmatpush.msra.mxu0 %v213
    %962 = vmatpush.msra.mxu0 %v209
    %963 = vmatpush.msra.mxu0 %v205
    %964 = vmatpush.msra.mxu0 %v201
    %965 = vmatpush.msra.mxu0 %v197
    %966 = vmatpush.msra.mxu0 %v193
    %967 = vmatpush.msra.mxu0 %v189
    %968 = vmatpush.msra.mxu0 %v185
    %969 = vmatpush.msra.mxu0 %v181
    %970 = vmatpush.msra.mxu0 %v177
    %971 = vmatpush.msra.mxu0 %v173
    %972 = vmatpush.msra.mxu0 %v169
    %973 = vmatpush.msra.mxu0 %v165
    %974 = vmatpush.msra.mxu0 %v161
    %975 = vmatmul.f32.gmra.mxu0 %v956
    %v976 = vpop.f32.mrf.mxu0
    %v977 = vadd.f32 0.0, %v976
    %978 = vdwg.mxu0
    %979 = vmatpush.msra.mxu0 %v222
    %980 = vmatpush.msra.mxu0 %v218
    %981 = vmatpush.msra.mxu0 %v214
    %982 = vmatpush.msra.mxu0 %v210
    %983 = vmatpush.msra.mxu0 %v206
    %984 = vmatpush.msra.mxu0 %v202
    %985 = vmatpush.msra.mxu0 %v198
    %986 = vmatpush.msra.mxu0 %v194
    %987 = vmatpush.msra.mxu0 %v190
    %988 = vmatpush.msra.mxu0 %v186
    %989 = vmatpush.msra.mxu0 %v182
    %990 = vmatpush.msra.mxu0 %v178
    %991 = vmatpush.msra.mxu0 %v174
    %992 = vmatpush.msra.mxu0 %v170
    %993 = vmatpush.msra.mxu0 %v166
    %994 = vmatpush.msra.mxu0 %v162
    %995 = vmatmul.f32.gmra.mxu0 %v956
    %v996 = vpop.f32.mrf.mxu0
    %v997 = vadd.f32 0.0, %v996
    %998 = vdwg.mxu0
    %999 = vmatpush.msra.mxu0 %v223
    %1000 = vmatpush.msra.mxu0 %v219
    %1001 = vmatpush.msra.mxu0 %v215
    %1002 = vmatpush.msra.mxu0 %v211
    %1003 = vmatpush.msra.mxu0 %v207
    %1004 = vmatpush.msra.mxu0 %v203
    %1005 = vmatpush.msra.mxu0 %v199
    %1006 = vmatpush.msra.mxu0 %v195
    %1007 = vmatpush.msra.mxu0 %v191
    %1008 = vmatpush.msra.mxu0 %v187
    %1009 = vmatpush.msra.mxu0 %v183
    %1010 = vmatpush.msra.mxu0 %v179
    %1011 = vmatpush.msra.mxu0 %v175
    %1012 = vmatpush.msra.mxu0 %v171
    %1013 = vmatpush.msra.mxu0 %v167
    %1014 = vmatpush.msra.mxu0 %v163
    %1015 = vmatmul.f32.gmra.mxu0 %v956
    %v1016 = vpop.f32.mrf.mxu0
    %v1017 = vadd.f32 0.0, %v1016
    %1018 = vdwg.mxu0
    %1019 = vmatpush.msra.mxu0 %v224
    %1020 = vmatpush.msra.mxu0 %v220
    %1021 = vmatpush.msra.mxu0 %v216
    %1022 = vmatpush.msra.mxu0 %v212
    %1023 = vmatpush.msra.mxu0 %v208
    %1024 = vmatpush.msra.mxu0 %v204
    %1025 = vmatpush.msra.mxu0 %v200
    %1026 = vmatpush.msra.mxu0 %v196
    %1027 = vmatpush.msra.mxu0 %v192
    %1028 = vmatpush.msra.mxu0 %v188
    %1029 = vmatpush.msra.mxu0 %v184
    %1030 = vmatpush.msra.mxu0 %v180
    %1031 = vmatpush.msra.mxu0 %v176
    %1032 = vmatpush.msra.mxu0 %v172
    %1033 = vmatpush.msra.mxu0 %v168
    %1034 = vmatpush.msra.mxu0 %v164
    %1035 = vmatmul.f32.gmra.mxu0 %v956
    %v1036 = vpop.f32.mrf.mxu0
    %v1037 = vadd.f32 0.0, %v1036
    %1038 = vdwg.mxu0
    %v1043 = vrot.slane %v997, 7
    %v1044 = vrot.slane %v1017, 6
    %v1045 = vrot.slane %v1037, 5
    %v1046 = vsel %vm313, %v977, %v1043
    %v1047 = vsel %vm315, %v1044, %v1045
    %v1048 = vsel %vm317, %v1046, %v1047
    %v1050 = vadd.f32 %v958, %v1048
    %v1051 = vxor.u32 %v1050, 2147483648
    %v1052 = vmul.f32 %v1051, 1.442695
    %v1053 = vpow.pop %v1052
    %v1054 = vadd.f32 %v1053, 1.0
    %v1055 = vrcp.pop %v1054
    %v1056 = vmul.f32 %v1054, %v1055
    %v1057 = vsub.f32 1.0, %v1056
    %v1058 = vmul.f32 %v1055, %v1057
    %v1059 = vadd.f32 %v1055, %v1058
    %vm1060 = vweird.f32 %v1054
    %vm1061 = vweird.f32 %v1055
    %vm1062 = vmor %vm1060, %vm1061
    %v1063 = vsel %vm1062, %v1055, %v1059
    %v1064 = vand.u32 2147483647, %v1054
    %vm1065 = vcmp.eq.f32.partialorder %v1064, 8.507059e+37
    %v1066 = vand.u32 %v1054, 2147483648
    %v1067 = vor.u32 1.1754944e-38, %v1066
    %v1068 = vsel %vm1065, %v1067, %v1063
    %v1069 = vmul.f32 1.0, %v1068
    %v1071 = vrot.slane %v1050, 2
    %v1073 = vtanh.pop %v1071
    %v1074 = vrot.slane %v1050, 3
    %v1076 = vxor.u32 %v1074, 2147483648
    %v1077 = vmul.f32 %v1076, 1.442695
    %v1078 = vpow.pop %v1077
    %v1079 = vadd.f32 %v1078, 1.0
    %v1080 = vrcp.pop %v1079
    %v1081 = vmul.f32 %v1079, %v1080
    %v1082 = vsub.f32 1.0, %v1081
    %v1083 = vmul.f32 %v1080, %v1082
    %v1084 = vadd.f32 %v1080, %v1083
    %vm1085 = vweird.f32 %v1079
    %vm1086 = vweird.f32 %v1080
    %vm1087 = vmor %vm1085, %vm1086
    %v1088 = vsel %vm1087, %v1080, %v1084
    %v1089 = vand.u32 2147483647, %v1079
    %vm1090 = vcmp.eq.f32.partialorder %v1089, 8.507059e+37
    %v1091 = vand.u32 %v1079, 2147483648
    %v1092 = vor.u32 1.1754944e-38, %v1091
    %v1093 = vsel %vm1090, %v1092, %v1088
    %v1094 = vmul.f32 1.0, %v1093
    %v1096 = vrot.slane %v1069, 1
    %v1098 = vmul.f32 %v1096, %v954
    %v1099 = vmul.f32 %v1069, %v1073
    %v1100 = vadd.f32 %v1098, %v1099
    %v1101 = vtanh.pop %v1100
    %v1102 = vmul.f32 %v1094, %v1101
    %s1103 = scalar_lea.vmem [#allocation2], 6
    %v1104 = vld [vmem:[%s1103] ss:$8 sm:$0xf]
    %1105 = vmatpush.msra.mxu0 %v221
    %1106 = vmatpush.msra.mxu0 %v217
    %1107 = vmatpush.msra.mxu0 %v213
    %1108 = vmatpush.msra.mxu0 %v209
    %1109 = vmatpush.msra.mxu0 %v205
    %1110 = vmatpush.msra.mxu0 %v201
    %1111 = vmatpush.msra.mxu0 %v197
    %1112 = vmatpush.msra.mxu0 %v193
    %1113 = vmatpush.msra.mxu0 %v189
    %1114 = vmatpush.msra.mxu0 %v185
    %1115 = vmatpush.msra.mxu0 %v181
    %1116 = vmatpush.msra.mxu0 %v177
    %1117 = vmatpush.msra.mxu0 %v173
    %1118 = vmatpush.msra.mxu0 %v169
    %1119 = vmatpush.msra.mxu0 %v165
    %1120 = vmatpush.msra.mxu0 %v161
    %1121 = vmatmul.f32.gmra.mxu0 %v1102
    %v1122 = vpop.f32.mrf.mxu0
    %v1123 = vadd.f32 0.0, %v1122
    %1124 = vdwg.mxu0
    %1125 = vmatpush.msra.mxu0 %v222
    %1126 = vmatpush.msra.mxu0 %v218
    %1127 = vmatpush.msra.mxu0 %v214
    %1128 = vmatpush.msra.mxu0 %v210
    %1129 = vmatpush.msra.mxu0 %v206
    %1130 = vmatpush.msra.mxu0 %v202
    %1131 = vmatpush.msra.mxu0 %v198
    %1132 = vmatpush.msra.mxu0 %v194
    %1133 = vmatpush.msra.mxu0 %v190
    %1134 = vmatpush.msra.mxu0 %v186
    %1135 = vmatpush.msra.mxu0 %v182
    %1136 = vmatpush.msra.mxu0 %v178
    %1137 = vmatpush.msra.mxu0 %v174
    %1138 = vmatpush.msra.mxu0 %v170
    %1139 = vmatpush.msra.mxu0 %v166
    %1140 = vmatpush.msra.mxu0 %v162
    %1141 = vmatmul.f32.gmra.mxu0 %v1102
    %v1142 = vpop.f32.mrf.mxu0
    %v1143 = vadd.f32 0.0, %v1142
    %1144 = vdwg.mxu0
    %1145 = vmatpush.msra.mxu0 %v223
    %1146 = vmatpush.msra.mxu0 %v219
    %1147 = vmatpush.msra.mxu0 %v215
    %1148 = vmatpush.msra.mxu0 %v211
    %1149 = vmatpush.msra.mxu0 %v207
    %1150 = vmatpush.msra.mxu0 %v203
    %1151 = vmatpush.msra.mxu0 %v199
    %1152 = vmatpush.msra.mxu0 %v195
    %1153 = vmatpush.msra.mxu0 %v191
    %1154 = vmatpush.msra.mxu0 %v187
    %1155 = vmatpush.msra.mxu0 %v183
    %1156 = vmatpush.msra.mxu0 %v179
    %1157 = vmatpush.msra.mxu0 %v175
    %1158 = vmatpush.msra.mxu0 %v171
    %1159 = vmatpush.msra.mxu0 %v167
    %1160 = vmatpush.msra.mxu0 %v163
    %1161 = vmatmul.f32.gmra.mxu0 %v1102
    %v1162 = vpop.f32.mrf.mxu0
    %v1163 = vadd.f32 0.0, %v1162
    %1164 = vdwg.mxu0
    %1165 = vmatpush.msra.mxu0 %v224
    %1166 = vmatpush.msra.mxu0 %v220
    %1167 = vmatpush.msra.mxu0 %v216
    %1168 = vmatpush.msra.mxu0 %v212
    %1169 = vmatpush.msra.mxu0 %v208
    %1170 = vmatpush.msra.mxu0 %v204
    %1171 = vmatpush.msra.mxu0 %v200
    %1172 = vmatpush.msra.mxu0 %v196
    %1173 = vmatpush.msra.mxu0 %v192
    %1174 = vmatpush.msra.mxu0 %v188
    %1175 = vmatpush.msra.mxu0 %v184
    %1176 = vmatpush.msra.mxu0 %v180
    %1177 = vmatpush.msra.mxu0 %v176
    %1178 = vmatpush.msra.mxu0 %v172
    %1179 = vmatpush.msra.mxu0 %v168
    %1180 = vmatpush.msra.mxu0 %v164
    %1181 = vmatmul.f32.gmra.mxu0 %v1102
    %v1182 = vpop.f32.mrf.mxu0
    %v1183 = vadd.f32 0.0, %v1182
    %1184 = vdwg.mxu0
    %v1189 = vrot.slane %v1143, 7
    %v1190 = vrot.slane %v1163, 6
    %v1191 = vrot.slane %v1183, 5
    %v1192 = vsel %vm313, %v1123, %v1189
    %v1193 = vsel %vm315, %v1190, %v1191
    %v1194 = vsel %vm317, %v1192, %v1193
    %v1196 = vadd.f32 %v1104, %v1194
    %v1197 = vxor.u32 %v1196, 2147483648
    %v1198 = vmul.f32 %v1197, 1.442695
    %v1199 = vpow.pop %v1198
    %v1200 = vadd.f32 %v1199, 1.0
    %v1201 = vrcp.pop %v1200
    %v1202 = vmul.f32 %v1200, %v1201
    %v1203 = vsub.f32 1.0, %v1202
    %v1204 = vmul.f32 %v1201, %v1203
    %v1205 = vadd.f32 %v1201, %v1204
    %vm1206 = vweird.f32 %v1200
    %vm1207 = vweird.f32 %v1201
    %vm1208 = vmor %vm1206, %vm1207
    %v1209 = vsel %vm1208, %v1201, %v1205
    %v1210 = vand.u32 2147483647, %v1200
    %vm1211 = vcmp.eq.f32.partialorder %v1210, 8.507059e+37
    %v1212 = vand.u32 %v1200, 2147483648
    %v1213 = vor.u32 1.1754944e-38, %v1212
    %v1214 = vsel %vm1211, %v1213, %v1209
    %v1215 = vmul.f32 1.0, %v1214
    %v1217 = vrot.slane %v1196, 2
    %v1219 = vtanh.pop %v1217
    %v1220 = vrot.slane %v1196, 3
    %v1222 = vxor.u32 %v1220, 2147483648
    %v1223 = vmul.f32 %v1222, 1.442695
    %v1224 = vpow.pop %v1223
    %v1225 = vadd.f32 %v1224, 1.0
    %v1226 = vrcp.pop %v1225
    %v1227 = vmul.f32 %v1225, %v1226
    %v1228 = vsub.f32 1.0, %v1227
    %v1229 = vmul.f32 %v1226, %v1228
    %v1230 = vadd.f32 %v1226, %v1229
    %vm1231 = vweird.f32 %v1225
    %vm1232 = vweird.f32 %v1226
    %vm1233 = vmor %vm1231, %vm1232
    %v1234 = vsel %vm1233, %v1226, %v1230
    %v1235 = vand.u32 2147483647, %v1225
    %vm1236 = vcmp.eq.f32.partialorder %v1235, 8.507059e+37
    %v1237 = vand.u32 %v1225, 2147483648
    %v1238 = vor.u32 1.1754944e-38, %v1237
    %v1239 = vsel %vm1236, %v1238, %v1234
    %v1240 = vmul.f32 1.0, %v1239
    %v1242 = vrot.slane %v1215, 1
    %v1244 = vmul.f32 %v1242, %v1100
    %v1245 = vmul.f32 %v1215, %v1219
    %v1246 = vadd.f32 %v1244, %v1245
    %v1247 = vtanh.pop %v1246
    %v1248 = vmul.f32 %v1240, %v1247
    %s1249 = scalar_lea.vmem [#allocation2], 7
    %v1250 = vld [vmem:[%s1249] ss:$8 sm:$0xf]
    %1251 = vmatpush.msra.mxu0 %v221
    %1252 = vmatpush.msra.mxu0 %v217
    %1253 = vmatpush.msra.mxu0 %v213
    %1254 = vmatpush.msra.mxu0 %v209
    %1255 = vmatpush.msra.mxu0 %v205
    %1256 = vmatpush.msra.mxu0 %v201
    %1257 = vmatpush.msra.mxu0 %v197
    %1258 = vmatpush.msra.mxu0 %v193
    %1259 = vmatpush.msra.mxu0 %v189
    %1260 = vmatpush.msra.mxu0 %v185
    %1261 = vmatpush.msra.mxu0 %v181
    %1262 = vmatpush.msra.mxu0 %v177
    %1263 = vmatpush.msra.mxu0 %v173
    %1264 = vmatpush.msra.mxu0 %v169
    %1265 = vmatpush.msra.mxu0 %v165
    %1266 = vmatpush.msra.mxu0 %v161
    %1267 = vmatmul.f32.gmra.mxu0 %v1248
    %v1268 = vpop.f32.mrf.mxu0
    %v1269 = vadd.f32 0.0, %v1268
    %1270 = vdwg.mxu0
    %1271 = vmatpush.msra.mxu0 %v222
    %1272 = vmatpush.msra.mxu0 %v218
    %1273 = vmatpush.msra.mxu0 %v214
    %1274 = vmatpush.msra.mxu0 %v210
    %1275 = vmatpush.msra.mxu0 %v206
    %1276 = vmatpush.msra.mxu0 %v202
    %1277 = vmatpush.msra.mxu0 %v198
    %1278 = vmatpush.msra.mxu0 %v194
    %1279 = vmatpush.msra.mxu0 %v190
    %1280 = vmatpush.msra.mxu0 %v186
    %1281 = vmatpush.msra.mxu0 %v182
    %1282 = vmatpush.msra.mxu0 %v178
    %1283 = vmatpush.msra.mxu0 %v174
    %1284 = vmatpush.msra.mxu0 %v170
    %1285 = vmatpush.msra.mxu0 %v166
    %1286 = vmatpush.msra.mxu0 %v162
    %1287 = vmatmul.f32.gmra.mxu0 %v1248
    %v1288 = vpop.f32.mrf.mxu0
    %v1289 = vadd.f32 0.0, %v1288
    %1290 = vdwg.mxu0
    %1291 = vmatpush.msra.mxu0 %v223
    %1292 = vmatpush.msra.mxu0 %v219
    %1293 = vmatpush.msra.mxu0 %v215
    %1294 = vmatpush.msra.mxu0 %v211
    %1295 = vmatpush.msra.mxu0 %v207
    %1296 = vmatpush.msra.mxu0 %v203
    %1297 = vmatpush.msra.mxu0 %v199
    %1298 = vmatpush.msra.mxu0 %v195
    %1299 = vmatpush.msra.mxu0 %v191
    %1300 = vmatpush.msra.mxu0 %v187
    %1301 = vmatpush.msra.mxu0 %v183
    %1302 = vmatpush.msra.mxu0 %v179
    %1303 = vmatpush.msra.mxu0 %v175
    %1304 = vmatpush.msra.mxu0 %v171
    %1305 = vmatpush.msra.mxu0 %v167
    %1306 = vmatpush.msra.mxu0 %v163
    %1307 = vmatmul.f32.gmra.mxu0 %v1248
    %v1308 = vpop.f32.mrf.mxu0
    %v1309 = vadd.f32 0.0, %v1308
    %1310 = vdwg.mxu0
    %1311 = vmatpush.msra.mxu0 %v224
    %1312 = vmatpush.msra.mxu0 %v220
    %1313 = vmatpush.msra.mxu0 %v216
    %1314 = vmatpush.msra.mxu0 %v212
    %1315 = vmatpush.msra.mxu0 %v208
    %1316 = vmatpush.msra.mxu0 %v204
    %1317 = vmatpush.msra.mxu0 %v200
    %1318 = vmatpush.msra.mxu0 %v196
    %1319 = vmatpush.msra.mxu0 %v192
    %1320 = vmatpush.msra.mxu0 %v188
    %1321 = vmatpush.msra.mxu0 %v184
    %1322 = vmatpush.msra.mxu0 %v180
    %1323 = vmatpush.msra.mxu0 %v176
    %1324 = vmatpush.msra.mxu0 %v172
    %1325 = vmatpush.msra.mxu0 %v168
    %1326 = vmatpush.msra.mxu0 %v164
    %1327 = vmatmul.f32.gmra.mxu0 %v1248
    %v1328 = vpop.f32.mrf.mxu0
    %v1329 = vadd.f32 0.0, %v1328
    %1330 = vdwg.mxu0
    %v1335 = vrot.slane %v1289, 7
    %v1336 = vrot.slane %v1309, 6
    %v1337 = vrot.slane %v1329, 5
    %v1338 = vsel %vm313, %v1269, %v1335
    %v1339 = vsel %vm315, %v1336, %v1337
    %v1340 = vsel %vm317, %v1338, %v1339
    %v1342 = vadd.f32 %v1250, %v1340
    %v1343 = vxor.u32 %v1342, 2147483648
    %v1344 = vmul.f32 %v1343, 1.442695
    %v1345 = vpow.pop %v1344
    %v1346 = vadd.f32 %v1345, 1.0
    %v1347 = vrcp.pop %v1346
    %v1348 = vmul.f32 %v1346, %v1347
    %v1349 = vsub.f32 1.0, %v1348
    %v1350 = vmul.f32 %v1347, %v1349
    %v1351 = vadd.f32 %v1347, %v1350
    %vm1352 = vweird.f32 %v1346
    %vm1353 = vweird.f32 %v1347
    %vm1354 = vmor %vm1352, %vm1353
    %v1355 = vsel %vm1354, %v1347, %v1351
    %v1356 = vand.u32 2147483647, %v1346
    %vm1357 = vcmp.eq.f32.partialorder %v1356, 8.507059e+37
    %v1358 = vand.u32 %v1346, 2147483648
    %v1359 = vor.u32 1.1754944e-38, %v1358
    %v1360 = vsel %vm1357, %v1359, %v1355
    %v1361 = vmul.f32 1.0, %v1360
    %v1363 = vrot.slane %v1342, 2
    %v1365 = vtanh.pop %v1363
    %v1366 = vrot.slane %v1342, 3
    %v1368 = vxor.u32 %v1366, 2147483648
    %v1369 = vmul.f32 %v1368, 1.442695
    %v1370 = vpow.pop %v1369
    %v1371 = vadd.f32 %v1370, 1.0
    %v1372 = vrcp.pop %v1371
    %v1373 = vmul.f32 %v1371, %v1372
    %v1374 = vsub.f32 1.0, %v1373
    %v1375 = vmul.f32 %v1372, %v1374
    %v1376 = vadd.f32 %v1372, %v1375
    %vm1377 = vweird.f32 %v1371
    %vm1378 = vweird.f32 %v1372
    %vm1379 = vmor %vm1377, %vm1378
    %v1380 = vsel %vm1379, %v1372, %v1376
    %v1381 = vand.u32 2147483647, %v1371
    %vm1382 = vcmp.eq.f32.partialorder %v1381, 8.507059e+37
    %v1383 = vand.u32 %v1371, 2147483648
    %v1384 = vor.u32 1.1754944e-38, %v1383
    %v1385 = vsel %vm1382, %v1384, %v1380
    %v1386 = vmul.f32 1.0, %v1385
    %v1388 = vrot.slane %v1361, 1
    %v1390 = vmul.f32 %v1388, %v1246
    %v1391 = vmul.f32 %v1361, %v1365
    %v1392 = vadd.f32 %v1390, %v1391
    %v1393 = vtanh.pop %v1392
    %v1394 = vmul.f32 %v1386, %v1393
    %v1395 = vld [vmem:[%s4] sm:$0xff]
    %v1396 = vld [vmem:[%s4 + $0x8] sm:$0xff]
    %v1397 = vld [vmem:[%s4 + $0x10] sm:$0xff]
    %v1398 = vld [vmem:[%s4 + $0x18] sm:$0xff]
    %v1399 = vld [vmem:[%s4 + $0x20] sm:$0xff]
    %v1400 = vld [vmem:[%s4 + $0x28] sm:$0xff]
    %v1401 = vld [vmem:[%s4 + $0x30] sm:$0xff]
    %v1402 = vld [vmem:[%s4 + $0x38] sm:$0xff]
    %v1403 = vld [vmem:[%s4 + $0x40] sm:$0xff]
    %v1404 = vld [vmem:[%s4 + $0x48] sm:$0xff]
    %v1405 = vld [vmem:[%s4 + $0x50] sm:$0xff]
    %v1406 = vld [vmem:[%s4 + $0x58] sm:$0xff]
    %v1407 = vld [vmem:[%s4 + $0x60] sm:$0xff]
    %v1408 = vld [vmem:[%s4 + $0x68] sm:$0xff]
    %v1409 = vld [vmem:[%s4 + $0x70] sm:$0xff]
    %v1410 = vld [vmem:[%s4 + $0x78] sm:$0xff]
    %v1411 = vld [vmem:[#allocation3] sm:$0x1]
    %1412 = vmatpush.msra.mxu0 %v1410
    %1413 = vmatpush.msra.mxu0 %v1409
    %1414 = vmatpush.msra.mxu0 %v1408
    %1415 = vmatpush.msra.mxu0 %v1407
    %1416 = vmatpush.msra.mxu0 %v1406
    %1417 = vmatpush.msra.mxu0 %v1405
    %1418 = vmatpush.msra.mxu0 %v1404
    %1419 = vmatpush.msra.mxu0 %v1403
    %1420 = vmatpush.msra.mxu0 %v1402
    %1421 = vmatpush.msra.mxu0 %v1401
    %1422 = vmatpush.msra.mxu0 %v1400
    %1423 = vmatpush.msra.mxu0 %v1399
    %1424 = vmatpush.msra.mxu0 %v1398
    %1425 = vmatpush.msra.mxu0 %v1397
    %1426 = vmatpush.msra.mxu0 %v1396
    %1427 = vmatpush.msra.mxu0 %v1395
    %1428 = vmatmul.f32.gmra.mxu0 %v1394
    %v1429 = vpop.f32.mrf.mxu0
    %v1430 = vadd.f32 %v1411, %v1429
    %1431 = vdwg.mxu0
    %vm1432 = vcmask 0
    %1433 = vst.msk [vmem:[#allocation7] sm:$0x1] %vm1432, %v1430
    // Predicated region
    $region30: #{tpu_custom_call.1} parent=1 // pred_check
      _
    $region31: #{tpu_custom_call.1} parent=1 // pred_check_branch
      %1435 = sbr.rel (0) target = $region33
    $region32: #{tpu_custom_call.1} parent=1 // pred_region
      %1437 = vsyncadd [#allocation6], 0
      %s1439 = sshll.u32 [#allocation7], 4
      %s1440 = int_to_ptr.vmem [resolvable:$true] %s1439
      %s1441 = sshll.u32 %s6, 4
      %s1442 = int_to_ptr.hbm [resolvable:$true] %s1441
      %1444 = dma.vmem_to_hbm [thread:$0]  %s1440, 16, %s1442, [#allocation6]
    $region33: #{tpu_custom_call.1} parent=1 // pred_fallthru
      _
    // Predicated region
    $region34: #{tpu_custom_call.1} parent=1 // pred_check
      _
    $region35: #{tpu_custom_call.1} parent=1 // pred_check_branch
      %1446 = sbr.rel (0) target = $region37
    $region36: #{tpu_custom_call.1} parent=1 // pred_region
      %1448 = dma.done [#allocation6], 16
    $region37: #{tpu_custom_call.1} parent=1 // pred_fallthru
      _
    %1449 = vsyncpa [#allocation5], 1
    %1450 = vsyncpa [#allocation6], 1

</llo_original>
